<compile_context>
chip_gen: v7x
topology: tpu7x:2x2x1
jax: 0.10.0
libtpu: 0.0.40
codegen_flags: <defaults>
</compile_context>

<pallas_src>
import functools

import jax
import jax.numpy as jnp
from jax import lax
from jax.experimental import pallas as pl
from jax.experimental.pallas import tpu as pltpu


def _cdiv(a, b):
    return -(-a // b)


def _round_up(n, m):
    return _cdiv(n, m) * m


def pack_params(params):
    """Pack (w1,b1,w2,b2,w3,b3) — w:(fan_in,fan_out), b:(1,fan_out) — into ONE
    padded f32 slab (a single DMA operand) plus a static dims dict with the row
    offsets of each sub-block. Done once, outside the hot loop."""
    w1, b1, w2, b2, w3, b3 = params
    w1t, w2t, w3t = w1.T, w2.T, w3.T  # (fan_out, fan_in) == torch nn.Linear storage
    h1, in_dim = w1t.shape
    h2, _ = w2t.shape
    out_dim, _ = w3t.shape

    # Row offsets, each 8-aligned (f32 sublanes) so in-kernel static slices stay aligned.
    r1 = 0
    r2 = r1 + _round_up(h1, 8)
    r3 = r2 + _round_up(h2, 8)
    rb = r3 + _round_up(out_dim, 8)
    rows = _round_up(rb + max(h1, h2, out_dim), 8)
    cols = _round_up(max(in_dim, h1, h2, 3), 128)

    slab = jnp.zeros((rows, cols), jnp.float32)
    slab = slab.at[r1:r1 + h1, :in_dim].set(w1t.astype(jnp.float32))
    slab = slab.at[r2:r2 + h2, :h1].set(w2t.astype(jnp.float32))
    slab = slab.at[r3:r3 + out_dim, :h2].set(w3t.astype(jnp.float32))
    slab = slab.at[rb:rb + h1, 0].set(b1[0].astype(jnp.float32))
    slab = slab.at[rb:rb + h2, 1].set(b2[0].astype(jnp.float32))
    slab = slab.at[rb:rb + out_dim, 2].set(b3[0].astype(jnp.float32))

    dims = dict(in_dim=in_dim, h1=h1, h2=h2, out_dim=out_dim,
                r1=r1, r2=r2, r3=r3, rb=rb)
    return slab, dims


def _make_kernel(dims):
    in_dim, h1, h2, out_dim = dims["in_dim"], dims["h1"], dims["h2"], dims["out_dim"]
    r1, r2, r3, rb = dims["r1"], dims["r2"], dims["r3"], dims["rb"]

    def kernel(x_ref, slab_ref, ot_ref):
        # Static slices of the packed parameter slab (free — no runtime cost).
        w1t = slab_ref[r1:r1 + h1, :in_dim]      # (h1, in_dim)
        w2t = slab_ref[r2:r2 + h2, :h1]          # (h2, h1)
        w3t = slab_ref[r3:r3 + out_dim, :h2]     # (out_dim, h2)
        b1 = slab_ref[rb:rb + h1, 0:1]
        b2 = slab_ref[rb:rb + h2, 1:2]
        b3 = slab_ref[rb:rb + out_dim, 2:3]

        x = x_ref[...]                           # (tb, in_dim), batch on sublanes
        # Layer 1: contract in_dim (last dims of both) -> (h1, tb); batch lands
        # on lanes with no wrapper-side transpose of x.
        a = lax.dot_general(w1t, x, (((1,), (1,)), ((), ())),
                            preferred_element_type=jnp.float32)
        a = jnp.maximum(a + b1, 0.0)
        # Layer 2: Linear + ReLU
        a = jnp.dot(w2t, a, preferred_element_type=jnp.float32)
        a = jnp.maximum(a + b2, 0.0)
        # Output layer: Linear (no activation); lane-dense (out_dim, tb) store.
        o = jnp.dot(w3t, a, preferred_element_type=jnp.float32) + b3
        ot_ref[...] = o.astype(ot_ref.dtype)

    return kernel


def _choose_tiles(batch, block_b):
    """Tile the batch with minimal padding and a v7x-friendly tile count."""
    num_tiles = max(1, _cdiv(batch, block_b))
    if num_tiles > 1 and num_tiles % 2:
        num_tiles += 1  # even step count: one tile per v7x TensorCore
    # Single tile: 8-aligned (pad <= 7 rows). Multi-tile: 128-aligned so the
    # lane-dense output block keeps a 128-divisible last dim.
    align = 8 if num_tiles == 1 else 128
    tb = _round_up(_cdiv(batch, num_tiles), align)
    return num_tiles, tb, num_tiles * tb


def make_nnet_forward(dims, *, block_b=4096, transposed_output=False):
    """Build forward(x:(B,in_dim), slab) for the given (static) layer dims."""
    kernel = _make_kernel(dims)
    in_dim, out_dim = dims["in_dim"], dims["out_dim"]
    h1, h2 = dims["h1"], dims["h2"]

    def forward(x, slab):
        batch = x.shape[0]
        num_tiles, tb, b_pad = _choose_tiles(batch, block_b)

        xp = x.astype(jnp.float32)
        if b_pad != batch:
            xp = jnp.pad(xp, ((0, b_pad - batch), (0, 0)))

        flops = 2 * b_pad * (in_dim * h1 + h1 * h2 + h2 * out_dim)
        bytes_accessed = 4 * (b_pad * in_dim + b_pad * out_dim + slab.size)

        out_t = pl.pallas_call(
            kernel,
            out_shape=jax.ShapeDtypeStruct((out_dim, b_pad), jnp.float32),
            grid_spec=pltpu.PrefetchScalarGridSpec(
                num_scalar_prefetch=0,
                grid=(num_tiles,),
                in_specs=[
                    pl.BlockSpec((tb, in_dim), lambda i: (i, 0)),  # activations stream
                    pl.BlockSpec(slab.shape, lambda i: (0, 0)),    # all params: 1 DMA, VMEM-resident
                ],
                out_specs=pl.BlockSpec((out_dim, tb), lambda i: (0, i)),
            ),
            compiler_params=pltpu.CompilerParams(
                dimension_semantics=("parallel",),  # megacore sharding on v7x
            ),
            cost_estimate=pl.CostEstimate(
                flops=flops, transcendentals=0, bytes_accessed=bytes_accessed),
        )(xp, slab)

        out_t = out_t[:, :batch]  # drop batch padding (no-op when unpadded)
        if transposed_output:
            return out_t          # (out_dim, batch) lane-dense, no relayout
        return out_t.T            # module convention: (batch, out_dim)

    return forward


def init_params(key, in_dim, hidden_layers, out_dim):
    """Deterministic init mimicking torch.nn.Linear's U(-1/sqrt(fan_in), ...)."""
    dims = [in_dim] + hidden_layers + [out_dim]
    params = []
    for fan_in, fan_out in zip(dims[:-1], dims[1:]):
        key, kw, kb = jax.random.split(key, 3)
        bound = 1.0 / jnp.sqrt(jnp.float32(fan_in))
        w = jax.random.uniform(kw, (fan_in, fan_out), jnp.float32, -bound, bound)
        b = jax.random.uniform(kb, (1, fan_out), jnp.float32, -bound, bound)
        params.extend([w, b])
    return tuple(params)


def reference_forward(x, params):
    w1, b1, w2, b2, w3, b3 = params
    h = jnp.maximum(x @ w1 + b1, 0.0)
    h = jnp.maximum(h @ w2 + b2, 0.0)
    return h @ w3 + b3


if __name__ == "__main__":
    # REINFORCE-style shapes: state dim 4 (CartPole), hidden [32, 32], 2 actions.
    in_dim, hidden, out_dim = 4, [32, 32], 2

    key = jax.random.PRNGKey(0)
    key, kx_big, kx_small = jax.random.split(key, 3)
    params = init_params(key, in_dim, hidden, out_dim)
    slab, dims = pack_params(params)

    fwd = jax.jit(make_nnet_forward(dims))                      # 1 grid step at batch=1024
    fwd_2tiles = jax.jit(make_nnet_forward(dims, block_b=512))  # 2-step grid (megacore path)

    # Large rollout-style batch.
    x_big = jax.random.normal(kx_big, (1024, in_dim), jnp.float32)
    ref_big = reference_forward(x_big, params)

    out_big = fwd(x_big, slab)
    jax.block_until_ready(out_big)
    assert out_big.shape == (1024, out_dim)
    assert jnp.allclose(out_big, ref_big, atol=2e-5, rtol=2e-5)

    # Multi-tile path (2 grid steps, parallel axis).
    out_big2 = fwd_2tiles(x_big, slab)
    jax.block_until_ready(out_big2)
    assert out_big2.shape == (1024, out_dim)
    assert jnp.allclose(out_big2, ref_big, atol=2e-5, rtol=2e-5)

    # Tiny, non-multiple-of-8 batch: exercises the padding path.
    x_small = jax.random.normal(kx_small, (7, in_dim), jnp.float32)
    out_small = fwd(x_small, slab)
    jax.block_until_ready(out_small)
    assert out_small.shape == (7, out_dim)
    assert jnp.allclose(out_small, reference_forward(x_small, params),
                        atol=2e-5, rtol=2e-5)

    print("KERNEL_OK")
</pallas_src>

<mosaic_0001>
module attributes {stable_mosaic.version = 11 : i64} {
  func.func @kernel(%arg0: i32, %arg1: memref<1024x4xf32, #tpu.memory_space<vmem>>, %arg2: memref<104x128xf32, #tpu.memory_space<vmem>>, %arg3: memref<2x1024xf32, #tpu.memory_space<vmem>>) attributes {dimension_semantics = [#tpu.dimension_semantics<parallel>], iteration_bounds = array<i64: 1>, scalar_prefetch = 0 : i64, scratch_operands = 0 : i64, tpu.core_type = #tpu.core_type<tc>, window_params = [{transform_indices = @transform_0, window_bounds = array<i64: 1024, 4>}, {pipeline_mode = #tpu.pipeline_mode<synchronous>, transform_indices = @transform_1, window_bounds = array<i64: 104, 128>}, {transform_indices = @transform_2, window_bounds = array<i64: 2, 1024>}]} {
    %c0 = arith.constant 0 : index
    %c0_0 = arith.constant 0 : index
    %0 = vector.load %arg2[%c0, %c0_0] : memref<104x128xf32, #tpu.memory_space<vmem>>, vector<32x4xf32>
    %c32 = arith.constant 32 : index
    %c0_1 = arith.constant 0 : index
    %1 = vector.load %arg2[%c32, %c0_1] : memref<104x128xf32, #tpu.memory_space<vmem>>, vector<32x32xf32>
    %c64 = arith.constant 64 : index
    %c0_2 = arith.constant 0 : index
    %2 = vector.load %arg2[%c64, %c0_2] : memref<104x128xf32, #tpu.memory_space<vmem>>, vector<2x32xf32>
    %c72 = arith.constant 72 : index
    %c0_3 = arith.constant 0 : index
    %3 = vector.load %arg2[%c72, %c0_3] : memref<104x128xf32, #tpu.memory_space<vmem>>, vector<32x1xf32>
    %c72_4 = arith.constant 72 : index
    %c1 = arith.constant 1 : index
    %4 = vector.load %arg2[%c72_4, %c1] : memref<104x128xf32, #tpu.memory_space<vmem>>, vector<32x1xf32>
    %c72_5 = arith.constant 72 : index
    %c2 = arith.constant 2 : index
    %5 = vector.load %arg2[%c72_5, %c2] : memref<104x128xf32, #tpu.memory_space<vmem>>, vector<2x1xf32>
    %c0_6 = arith.constant 0 : index
    %c0_7 = arith.constant 0 : index
    %6 = vector.load %arg1[%c0_6, %c0_7] : memref<1024x4xf32, #tpu.memory_space<vmem>>, vector<1024x4xf32>
    %cst = arith.constant dense<0.000000e+00> : vector<32x1024xf32>
    %7 = tpu.matmul %0, %6, %cst {dimension_numbers = #tpu.dot_dimension_numbers<[1], [1], [0], [0], [0, 0, 1, 0], [], []>} : vector<32x4xf32>, vector<1024x4xf32>, vector<32x1024xf32> -> vector<32x1024xf32>
    %8 = vector.broadcast %3 : vector<32x1xf32> to vector<32x1024xf32>
    %9 = arith.addf %7, %8 : vector<32x1024xf32>
    %cst_8 = arith.constant 0.000000e+00 : f32
    %10 = vector.broadcast %cst_8 : f32 to vector<32x1024xf32>
    %11 = arith.maximumf %9, %10 : vector<32x1024xf32>
    %cst_9 = arith.constant dense<0.000000e+00> : vector<32x1024xf32>
    %12 = tpu.matmul %1, %11, %cst_9 {dimension_numbers = #tpu.dot_dimension_numbers<[1], [0], [0], [1], [0, 0, 1, 1], [], []>} : vector<32x32xf32>, vector<32x1024xf32>, vector<32x1024xf32> -> vector<32x1024xf32>
    %13 = vector.broadcast %4 : vector<32x1xf32> to vector<32x1024xf32>
    %14 = arith.addf %12, %13 : vector<32x1024xf32>
    %cst_10 = arith.constant 0.000000e+00 : f32
    %15 = vector.broadcast %cst_10 : f32 to vector<32x1024xf32>
    %16 = arith.maximumf %14, %15 : vector<32x1024xf32>
    %cst_11 = arith.constant dense<0.000000e+00> : vector<2x1024xf32>
    %17 = tpu.matmul %2, %16, %cst_11 {dimension_numbers = #tpu.dot_dimension_numbers<[1], [0], [0], [1], [0, 0, 1, 1], [], []>} : vector<2x32xf32>, vector<32x1024xf32>, vector<2x1024xf32> -> vector<2x1024xf32>
    %18 = vector.broadcast %5 : vector<2x1xf32> to vector<2x1024xf32>
    %19 = arith.addf %17, %18 : vector<2x1024xf32>
    %c0_12 = arith.constant 0 : index
    %c0_13 = arith.constant 0 : index
    %20 = vector.load %arg3[%c0_12, %c0_13] : memref<2x1024xf32, #tpu.memory_space<vmem>>, vector<2x1024xf32>
    tpu.vector_store %arg3[%c0_12, %c0_13], %19 {strides = array<i32>} : memref<2x1024xf32, #tpu.memory_space<vmem>>, vector<2x1024xf32>,
    return
  }
  func.func @transform_0(%arg0: i32) -> (i32, i32) {
    %c0_i32 = arith.constant 0 : i32
    %c0_i32_0 = arith.constant 0 : i32
    return %arg0, %c0_i32 : i32, i32
  }
  func.func @transform_1(%arg0: i32) -> (i32, i32) {
    %c0_i32 = arith.constant 0 : i32
    %c0_i32_0 = arith.constant 0 : i32
    %c0_i32_1 = arith.constant 0 : i32
    return %c0_i32, %c0_i32_0 : i32, i32
  }
  func.func @transform_2(%arg0: i32) -> (i32, i32) {
    %c0_i32 = arith.constant 0 : i32
    %c0_i32_0 = arith.constant 0 : i32
    return %c0_i32, %arg0 : i32, i32
  }
}

</mosaic_0001>

<llo_original>
// kernel: forward.1
$region0: #{forward.1}
  #allocation0 [shape = 'u32[]', space=smem, size = 0x4, offset = 0x4, fixed_abs, tag = 'smem constant byte address 0x4 - core index']
  #allocation1 [shape = 'u32[144,128]{1,0:T(1,128)}', space=vmem, size = 0x12000, scoped, tag = 'internal scratch']
  %s0 = inlined_call_operand.vmem [shape: f32[1024,4], index: 0, kind: input, shape index: {}]
  %s1 = inlined_call_operand.vmem [shape: f32[104,128], index: 1, kind: input, shape index: {}]
  %s2 = inlined_call_operand.hbm [shape: f32[2,1024], index: 2, kind: output, shape index: {}]
  %s3 = sld [smem:[#allocation0]]
  $region18: #{forward.1} parent=0
    _
  %s5 = ssub.s32 1, %s3
  %s6 = scalar_select 0, %s5, %s3
  $region1: #{forward.1} parent=0
    #allocation2 [shape = 'u8[8192]{0}', space=vmem, size = 0x2000, scoped, tag = 'output window, operand 0, single buffered']
    #allocation3 [shape = 's32[1]{0}', space=sflag, size = 0x4, scoped, tag = 'scoped memory for forward.1']
    %7 = vsyncpa [#allocation3], 0
    // Predicated region
    $region2: #{forward.1} parent=1 // pred_check
      _
    $region3: #{forward.1} parent=1 // pred_check_branch
      %9 = sbr.rel (0) target = $region5
    $region4: #{forward.1} parent=1 // pred_region
      _
    $region5: #{forward.1} parent=1 // pred_fallthru
      _
    // Predicated region
    $region6: #{forward.1} parent=1 // pred_check
      _
    $region7: #{forward.1} parent=1 // pred_check_branch
      %11 = sbr.rel (0) target = $region9
    $region8: #{forward.1} parent=1 // pred_region
      _
    $region9: #{forward.1} parent=1 // pred_fallthru
      _
    %v12 = vld [vmem:[%s1] sm:$0xff]
    %v13 = vld [vmem:[%s1 + $0x8] sm:$0xff]
    %v14 = vld [vmem:[%s1 + $0x10] sm:$0xff]
    %v15 = vld [vmem:[%s1 + $0x18] sm:$0xff]
    %v16 = vld [vmem:[%s1 + $0x20] sm:$0xff]
    %v17 = vld [vmem:[%s1 + $0x28] sm:$0xff]
    %v18 = vld [vmem:[%s1 + $0x30] sm:$0xff]
    %v19 = vld [vmem:[%s1 + $0x38] sm:$0xff]
    %v20 = vld [vmem:[%s1 + $0x40] sm:$0x3]
    %v21 = vld [vmem:[%s1 + $0x48] sm:$0xff]
    %v22 = vld [vmem:[%s1 + $0x50] sm:$0xff]
    %v23 = vld [vmem:[%s1 + $0x58] sm:$0xff]
    %v24 = vld [vmem:[%s1 + $0x60] sm:$0xff]
    %v25 = vld [vmem:[%s1 + $0x48] sm:$0x3]
    %v26 = vld [vmem:[%s0] sm:$0xff]
    %v27 = vld [vmem:[%s0 + $0x8] sm:$0xff]
    %v28 = vld [vmem:[%s0 + $0x10] sm:$0xff]
    %v29 = vld [vmem:[%s0 + $0x18] sm:$0xff]
    %v30 = vld [vmem:[%s0 + $0x20] sm:$0xff]
    %v31 = vld [vmem:[%s0 + $0x28] sm:$0xff]
    %v32 = vld [vmem:[%s0 + $0x30] sm:$0xff]
    %v33 = vld [vmem:[%s0 + $0x38] sm:$0xff]
    %v34 = vld [vmem:[%s0 + $0x40] sm:$0xff]
    %v35 = vld [vmem:[%s0 + $0x48] sm:$0xff]
    %v36 = vld [vmem:[%s0 + $0x50] sm:$0xff]
    %v37 = vld [vmem:[%s0 + $0x58] sm:$0xff]
    %v38 = vld [vmem:[%s0 + $0x60] sm:$0xff]
    %v39 = vld [vmem:[%s0 + $0x68] sm:$0xff]
    %v40 = vld [vmem:[%s0 + $0x70] sm:$0xff]
    %v41 = vld [vmem:[%s0 + $0x78] sm:$0xff]
    %v42 = vld [vmem:[%s0 + $0x80] sm:$0xff]
    %v43 = vld [vmem:[%s0 + $0x88] sm:$0xff]
    %v44 = vld [vmem:[%s0 + $0x90] sm:$0xff]
    %v45 = vld [vmem:[%s0 + $0x98] sm:$0xff]
    %v46 = vld [vmem:[%s0 + $0xa0] sm:$0xff]
    %v47 = vld [vmem:[%s0 + $0xa8] sm:$0xff]
    %v48 = vld [vmem:[%s0 + $0xb0] sm:$0xff]
    %v49 = vld [vmem:[%s0 + $0xb8] sm:$0xff]
    %v50 = vld [vmem:[%s0 + $0xc0] sm:$0xff]
    %v51 = vld [vmem:[%s0 + $0xc8] sm:$0xff]
    %v52 = vld [vmem:[%s0 + $0xd0] sm:$0xff]
    %v53 = vld [vmem:[%s0 + $0xd8] sm:$0xff]
    %v54 = vld [vmem:[%s0 + $0xe0] sm:$0xff]
    %v55 = vld [vmem:[%s0 + $0xe8] sm:$0xff]
    %v56 = vld [vmem:[%s0 + $0xf0] sm:$0xff]
    %v57 = vld [vmem:[%s0 + $0xf8] sm:$0xff]
    %v58 = vld [vmem:[%s0 + $0x100] sm:$0xff]
    %v59 = vld [vmem:[%s0 + $0x108] sm:$0xff]
    %v60 = vld [vmem:[%s0 + $0x110] sm:$0xff]
    %v61 = vld [vmem:[%s0 + $0x118] sm:$0xff]
    %v62 = vld [vmem:[%s0 + $0x120] sm:$0xff]
    %v63 = vld [vmem:[%s0 + $0x128] sm:$0xff]
    %v64 = vld [vmem:[%s0 + $0x130] sm:$0xff]
    %v65 = vld [vmem:[%s0 + $0x138] sm:$0xff]
    %v66 = vld [vmem:[%s0 + $0x140] sm:$0xff]
    %v67 = vld [vmem:[%s0 + $0x148] sm:$0xff]
    %v68 = vld [vmem:[%s0 + $0x150] sm:$0xff]
    %v69 = vld [vmem:[%s0 + $0x158] sm:$0xff]
    %v70 = vld [vmem:[%s0 + $0x160] sm:$0xff]
    %v71 = vld [vmem:[%s0 + $0x168] sm:$0xff]
    %v72 = vld [vmem:[%s0 + $0x170] sm:$0xff]
    %v73 = vld [vmem:[%s0 + $0x178] sm:$0xff]
    %v74 = vld [vmem:[%s0 + $0x180] sm:$0xff]
    %v75 = vld [vmem:[%s0 + $0x188] sm:$0xff]
    %v76 = vld [vmem:[%s0 + $0x190] sm:$0xff]
    %v77 = vld [vmem:[%s0 + $0x198] sm:$0xff]
    %v78 = vld [vmem:[%s0 + $0x1a0] sm:$0xff]
    %v79 = vld [vmem:[%s0 + $0x1a8] sm:$0xff]
    %v80 = vld [vmem:[%s0 + $0x1b0] sm:$0xff]
    %v81 = vld [vmem:[%s0 + $0x1b8] sm:$0xff]
    %v82 = vld [vmem:[%s0 + $0x1c0] sm:$0xff]
    %v83 = vld [vmem:[%s0 + $0x1c8] sm:$0xff]
    %v84 = vld [vmem:[%s0 + $0x1d0] sm:$0xff]
    %v85 = vld [vmem:[%s0 + $0x1d8] sm:$0xff]
    %v86 = vld [vmem:[%s0 + $0x1e0] sm:$0xff]
    %v87 = vld [vmem:[%s0 + $0x1e8] sm:$0xff]
    %v88 = vld [vmem:[%s0 + $0x1f0] sm:$0xff]
    %v89 = vld [vmem:[%s0 + $0x1f8] sm:$0xff]
    %v90 = vld [vmem:[%s0 + $0x200] sm:$0xff]
    %v91 = vld [vmem:[%s0 + $0x208] sm:$0xff]
    %v92 = vld [vmem:[%s0 + $0x210] sm:$0xff]
    %v93 = vld [vmem:[%s0 + $0x218] sm:$0xff]
    %v94 = vld [vmem:[%s0 + $0x220] sm:$0xff]
    %v95 = vld [vmem:[%s0 + $0x228] sm:$0xff]
    %v96 = vld [vmem:[%s0 + $0x230] sm:$0xff]
    %v97 = vld [vmem:[%s0 + $0x238] sm:$0xff]
    %v98 = vld [vmem:[%s0 + $0x240] sm:$0xff]
    %v99 = vld [vmem:[%s0 + $0x248] sm:$0xff]
    %v100 = vld [vmem:[%s0 + $0x250] sm:$0xff]
    %v101 = vld [vmem:[%s0 + $0x258] sm:$0xff]
    %v102 = vld [vmem:[%s0 + $0x260] sm:$0xff]
    %v103 = vld [vmem:[%s0 + $0x268] sm:$0xff]
    %v104 = vld [vmem:[%s0 + $0x270] sm:$0xff]
    %v105 = vld [vmem:[%s0 + $0x278] sm:$0xff]
    %v106 = vld [vmem:[%s0 + $0x280] sm:$0xff]
    %v107 = vld [vmem:[%s0 + $0x288] sm:$0xff]
    %v108 = vld [vmem:[%s0 + $0x290] sm:$0xff]
    %v109 = vld [vmem:[%s0 + $0x298] sm:$0xff]
    %v110 = vld [vmem:[%s0 + $0x2a0] sm:$0xff]
    %v111 = vld [vmem:[%s0 + $0x2a8] sm:$0xff]
    %v112 = vld [vmem:[%s0 + $0x2b0] sm:$0xff]
    %v113 = vld [vmem:[%s0 + $0x2b8] sm:$0xff]
    %v114 = vld [vmem:[%s0 + $0x2c0] sm:$0xff]
    %v115 = vld [vmem:[%s0 + $0x2c8] sm:$0xff]
    %v116 = vld [vmem:[%s0 + $0x2d0] sm:$0xff]
    %v117 = vld [vmem:[%s0 + $0x2d8] sm:$0xff]
    %v118 = vld [vmem:[%s0 + $0x2e0] sm:$0xff]
    %v119 = vld [vmem:[%s0 + $0x2e8] sm:$0xff]
    %v120 = vld [vmem:[%s0 + $0x2f0] sm:$0xff]
    %v121 = vld [vmem:[%s0 + $0x2f8] sm:$0xff]
    %v122 = vld [vmem:[%s0 + $0x300] sm:$0xff]
    %v123 = vld [vmem:[%s0 + $0x308] sm:$0xff]
    %v124 = vld [vmem:[%s0 + $0x310] sm:$0xff]
    %v125 = vld [vmem:[%s0 + $0x318] sm:$0xff]
    %v126 = vld [vmem:[%s0 + $0x320] sm:$0xff]
    %v127 = vld [vmem:[%s0 + $0x328] sm:$0xff]
    %v128 = vld [vmem:[%s0 + $0x330] sm:$0xff]
    %v129 = vld [vmem:[%s0 + $0x338] sm:$0xff]
    %v130 = vld [vmem:[%s0 + $0x340] sm:$0xff]
    %v131 = vld [vmem:[%s0 + $0x348] sm:$0xff]
    %v132 = vld [vmem:[%s0 + $0x350] sm:$0xff]
    %v133 = vld [vmem:[%s0 + $0x358] sm:$0xff]
    %v134 = vld [vmem:[%s0 + $0x360] sm:$0xff]
    %v135 = vld [vmem:[%s0 + $0x368] sm:$0xff]
    %v136 = vld [vmem:[%s0 + $0x370] sm:$0xff]
    %v137 = vld [vmem:[%s0 + $0x378] sm:$0xff]
    %v138 = vld [vmem:[%s0 + $0x380] sm:$0xff]
    %v139 = vld [vmem:[%s0 + $0x388] sm:$0xff]
    %v140 = vld [vmem:[%s0 + $0x390] sm:$0xff]
    %v141 = vld [vmem:[%s0 + $0x398] sm:$0xff]
    %v142 = vld [vmem:[%s0 + $0x3a0] sm:$0xff]
    %v143 = vld [vmem:[%s0 + $0x3a8] sm:$0xff]
    %v144 = vld [vmem:[%s0 + $0x3b0] sm:$0xff]
    %v145 = vld [vmem:[%s0 + $0x3b8] sm:$0xff]
    %v146 = vld [vmem:[%s0 + $0x3c0] sm:$0xff]
    %v147 = vld [vmem:[%s0 + $0x3c8] sm:$0xff]
    %v148 = vld [vmem:[%s0 + $0x3d0] sm:$0xff]
    %v149 = vld [vmem:[%s0 + $0x3d8] sm:$0xff]
    %v150 = vld [vmem:[%s0 + $0x3e0] sm:$0xff]
    %v151 = vld [vmem:[%s0 + $0x3e8] sm:$0xff]
    %v152 = vld [vmem:[%s0 + $0x3f0] sm:$0xff]
    %v153 = vld [vmem:[%s0 + $0x3f8] sm:$0xff]
    %155 = vset.pattern.permute.xlu0 0
    %156 = vperm.xlu0 %155, %v21
    %v157 = vpop.permute.xlu0 %156
    %160 = vset.pattern.permute.xlu0 0
    %161 = vperm.xlu0 %160, %v22
    %v162 = vpop.permute.xlu0 %161
    %165 = vset.pattern.permute.xlu0 0
    %166 = vperm.xlu0 %165, %v23
    %v167 = vpop.permute.xlu0 %166
    %170 = vset.pattern.permute.xlu0 0
    %171 = vperm.xlu0 %170, %v24
    %v172 = vpop.permute.xlu0 %171
    %vm174 = vcmask 31744
    %v176 = vsel %vm174, %v12, 0
    %v179 = vsel %vm174, %v13, 0
    %v182 = vsel %vm174, %v14, 0
    %v185 = vsel %vm174, %v15, 0
    %v188 = vsel %vm174, %v26, 0
    %v191 = vsel %vm174, %v27, 0
    %v194 = vsel %vm174, %v28, 0
    %v197 = vsel %vm174, %v29, 0
    %v200 = vsel %vm174, %v30, 0
    %v203 = vsel %vm174, %v31, 0
    %v206 = vsel %vm174, %v32, 0
    %v209 = vsel %vm174, %v33, 0
    %v212 = vsel %vm174, %v34, 0
    %v215 = vsel %vm174, %v35, 0
    %v218 = vsel %vm174, %v36, 0
    %v221 = vsel %vm174, %v37, 0
    %v224 = vsel %vm174, %v38, 0
    %v227 = vsel %vm174, %v39, 0
    %v230 = vsel %vm174, %v40, 0
    %v233 = vsel %vm174, %v41, 0
    %v236 = vsel %vm174, %v42, 0
    %v239 = vsel %vm174, %v43, 0
    %v242 = vsel %vm174, %v44, 0
    %v245 = vsel %vm174, %v45, 0
    %v248 = vsel %vm174, %v46, 0
    %v251 = vsel %vm174, %v47, 0
    %v254 = vsel %vm174, %v48, 0
    %v257 = vsel %vm174, %v49, 0
    %v260 = vsel %vm174, %v50, 0
    %v263 = vsel %vm174, %v51, 0
    %v266 = vsel %vm174, %v52, 0
    %v269 = vsel %vm174, %v53, 0
    %v272 = vsel %vm174, %v54, 0
    %v275 = vsel %vm174, %v55, 0
    %v278 = vsel %vm174, %v56, 0
    %v281 = vsel %vm174, %v57, 0
    %v284 = vsel %vm174, %v58, 0
    %v287 = vsel %vm174, %v59, 0
    %v290 = vsel %vm174, %v60, 0
    %v293 = vsel %vm174, %v61, 0
    %v296 = vsel %vm174, %v62, 0
    %v299 = vsel %vm174, %v63, 0
    %v302 = vsel %vm174, %v64, 0
    %v305 = vsel %vm174, %v65, 0
    %v308 = vsel %vm174, %v66, 0
    %v311 = vsel %vm174, %v67, 0
    %v314 = vsel %vm174, %v68, 0
    %v317 = vsel %vm174, %v69, 0
    %v320 = vsel %vm174, %v70, 0
    %v323 = vsel %vm174, %v71, 0
    %v326 = vsel %vm174, %v72, 0
    %v329 = vsel %vm174, %v73, 0
    %v332 = vsel %vm174, %v74, 0
    %v335 = vsel %vm174, %v75, 0
    %v338 = vsel %vm174, %v76, 0
    %v341 = vsel %vm174, %v77, 0
    %v344 = vsel %vm174, %v78, 0
    %v347 = vsel %vm174, %v79, 0
    %v350 = vsel %vm174, %v80, 0
    %v353 = vsel %vm174, %v81, 0
    %v356 = vsel %vm174, %v82, 0
    %v359 = vsel %vm174, %v83, 0
    %v362 = vsel %vm174, %v84, 0
    %v365 = vsel %vm174, %v85, 0
    %v368 = vsel %vm174, %v86, 0
    %v371 = vsel %vm174, %v87, 0
    %v374 = vsel %vm174, %v88, 0
    %v377 = vsel %vm174, %v89, 0
    %v380 = vsel %vm174, %v90, 0
    %v383 = vsel %vm174, %v91, 0
    %v386 = vsel %vm174, %v92, 0
    %v389 = vsel %vm174, %v93, 0
    %v392 = vsel %vm174, %v94, 0
    %v395 = vsel %vm174, %v95, 0
    %v398 = vsel %vm174, %v96, 0
    %v401 = vsel %vm174, %v97, 0
    %v404 = vsel %vm174, %v98, 0
    %v407 = vsel %vm174, %v99, 0
    %v410 = vsel %vm174, %v100, 0
    %v413 = vsel %vm174, %v101, 0
    %v416 = vsel %vm174, %v102, 0
    %v419 = vsel %vm174, %v103, 0
    %v422 = vsel %vm174, %v104, 0
    %v425 = vsel %vm174, %v105, 0
    %v428 = vsel %vm174, %v106, 0
    %v431 = vsel %vm174, %v107, 0
    %v434 = vsel %vm174, %v108, 0
    %v437 = vsel %vm174, %v109, 0
    %v440 = vsel %vm174, %v110, 0
    %v443 = vsel %vm174, %v111, 0
    %v446 = vsel %vm174, %v112, 0
    %v449 = vsel %vm174, %v113, 0
    %v452 = vsel %vm174, %v114, 0
    %v455 = vsel %vm174, %v115, 0
    %v458 = vsel %vm174, %v116, 0
    %v461 = vsel %vm174, %v117, 0
    %v464 = vsel %vm174, %v118, 0
    %v467 = vsel %vm174, %v119, 0
    %v470 = vsel %vm174, %v120, 0
    %v473 = vsel %vm174, %v121, 0
    %v476 = vsel %vm174, %v122, 0
    %v479 = vsel %vm174, %v123, 0
    %v482 = vsel %vm174, %v124, 0
    %v485 = vsel %vm174, %v125, 0
    %v488 = vsel %vm174, %v126, 0
    %v491 = vsel %vm174, %v127, 0
    %v494 = vsel %vm174, %v128, 0
    %v497 = vsel %vm174, %v129, 0
    %v500 = vsel %vm174, %v130, 0
    %v503 = vsel %vm174, %v131, 0
    %v506 = vsel %vm174, %v132, 0
    %v509 = vsel %vm174, %v133, 0
    %v512 = vsel %vm174, %v134, 0
    %v515 = vsel %vm174, %v135, 0
    %v518 = vsel %vm174, %v136, 0
    %v521 = vsel %vm174, %v137, 0
    %v524 = vsel %vm174, %v138, 0
    %v527 = vsel %vm174, %v139, 0
    %v530 = vsel %vm174, %v140, 0
    %v533 = vsel %vm174, %v141, 0
    %v536 = vsel %vm174, %v142, 0
    %v539 = vsel %vm174, %v143, 0
    %v542 = vsel %vm174, %v144, 0
    %v545 = vsel %vm174, %v145, 0
    %v548 = vsel %vm174, %v146, 0
    %v551 = vsel %vm174, %v147, 0
    %v554 = vsel %vm174, %v148, 0
    %v557 = vsel %vm174, %v149, 0
    %v560 = vsel %vm174, %v150, 0
    %v563 = vsel %vm174, %v151, 0
    %v566 = vsel %vm174, %v152, 0
    %v569 = vsel %vm174, %v153, 0
    %571 = vmatprep.subr.mxu0 0.0
    %572 = vmatpush1.xpose.msra.mxu0 %v188
    %573 = vmatprep.subr.mxu0 0.0
    %574 = vmatpush1.xpose.msra.mxu0 %v191
    %575 = vmatprep.subr.mxu0 0.0
    %576 = vmatpush1.xpose.msra.mxu0 %v194
    %577 = vmatprep.subr.mxu0 0.0
    %578 = vmatpush1.xpose.msra.mxu0 %v197
    %579 = vmatprep.subr.mxu0 0.0
    %580 = vmatpush1.xpose.msra.mxu0 %v200
    %581 = vmatprep.subr.mxu0 0.0
    %582 = vmatpush1.xpose.msra.mxu0 %v203
    %583 = vmatprep.subr.mxu0 0.0
    %584 = vmatpush1.xpose.msra.mxu0 %v206
    %585 = vmatprep.subr.mxu0 0.0
    %586 = vmatpush1.xpose.msra.mxu0 %v209
    %587 = vmatprep.subr.mxu0 0.0
    %588 = vmatpush1.xpose.msra.mxu0 %v212
    %589 = vmatprep.subr.mxu0 0.0
    %590 = vmatpush1.xpose.msra.mxu0 %v215
    %591 = vmatprep.subr.mxu0 0.0
    %592 = vmatpush1.xpose.msra.mxu0 %v218
    %593 = vmatprep.subr.mxu0 0.0
    %594 = vmatpush1.xpose.msra.mxu0 %v221
    %595 = vmatprep.subr.mxu0 0.0
    %596 = vmatpush1.xpose.msra.mxu0 %v224
    %597 = vmatprep.subr.mxu0 0.0
    %598 = vmatpush1.xpose.msra.mxu0 %v227
    %599 = vmatprep.subr.mxu0 0.0
    %600 = vmatpush1.xpose.msra.mxu0 %v230
    %601 = vmatprep.subr.mxu0 0.0
    %602 = vmatpush1.xpose.msra.mxu0 %v233
    %603 = vmatprep.subr.mxu0 0.0
    %604 = vmatpush1.xpose.msra.mxu0 %v236
    %605 = vmatprep.subr.mxu0 0.0
    %606 = vmatpush1.xpose.msra.mxu0 %v239
    %607 = vmatprep.subr.mxu0 0.0
    %608 = vmatpush1.xpose.msra.mxu0 %v242
    %609 = vmatprep.subr.mxu0 0.0
    %610 = vmatpush1.xpose.msra.mxu0 %v245
    %611 = vmatprep.subr.mxu0 0.0
    %612 = vmatpush1.xpose.msra.mxu0 %v248
    %613 = vmatprep.subr.mxu0 0.0
    %614 = vmatpush1.xpose.msra.mxu0 %v251
    %615 = vmatprep.subr.mxu0 0.0
    %616 = vmatpush1.xpose.msra.mxu0 %v254
    %617 = vmatprep.subr.mxu0 0.0
    %618 = vmatpush1.xpose.msra.mxu0 %v257
    %619 = vmatprep.subr.mxu0 0.0
    %620 = vmatpush1.xpose.msra.mxu0 %v260
    %621 = vmatprep.subr.mxu0 0.0
    %622 = vmatpush1.xpose.msra.mxu0 %v263
    %623 = vmatprep.subr.mxu0 0.0
    %624 = vmatpush1.xpose.msra.mxu0 %v266
    %625 = vmatprep.subr.mxu0 0.0
    %626 = vmatpush1.xpose.msra.mxu0 %v269
    %627 = vmatprep.subr.mxu0 0.0
    %628 = vmatpush1.xpose.msra.mxu0 %v272
    %629 = vmatprep.subr.mxu0 0.0
    %630 = vmatpush1.xpose.msra.mxu0 %v275
    %631 = vmatprep.subr.mxu0 0.0
    %632 = vmatpush1.xpose.msra.mxu0 %v278
    %633 = vmatprep.subr.mxu0 0.0
    %634 = vmatpush1.xpose.msra.mxu0 %v281
    %635 = vmatprep.mubr.f32.mxu0 0.0
    %636 = vmatmul.mubr.f32.gmra.mrb[0].mxu0 %v176
    %v637 = vpop.f32.mrb[0].mxu0
    %v638 = vadd.f32 %v157, %v637
    %v639 = vpop.f32.mrb[0].mxu0
    %v640 = vadd.f32 %v157, %v639
    %641 = vmatprep.mubr.f32.mxu0 0.0
    %642 = vmatmul.mubr.f32.gmra.mrb[0].mxu0 %v179
    %v643 = vpop.f32.mrb[0].mxu0
    %v644 = vadd.f32 %v162, %v643
    %v645 = vpop.f32.mrb[0].mxu0
    %v646 = vadd.f32 %v162, %v645
    %647 = vmatprep.mubr.f32.mxu0 0.0
    %648 = vmatmul.mubr.f32.gmra.mrb[0].mxu0 %v182
    %v649 = vpop.f32.mrb[0].mxu0
    %v650 = vadd.f32 %v167, %v649
    %v651 = vpop.f32.mrb[0].mxu0
    %v652 = vadd.f32 %v167, %v651
    %653 = vmatprep.mubr.f32.mxu0 0.0
    %654 = vmatmul.mubr.f32.gmra.mrb[0].mxu0 %v185
    %v655 = vpop.f32.mrb[0].mxu0
    %v656 = vadd.f32 %v172, %v655
    %v657 = vpop.f32.mrb[0].mxu0
    %v658 = vadd.f32 %v172, %v657
    %659 = vdwg.mxu0
    %660 = vmatprep.subr.mxu0 0.0
    %661 = vmatpush1.xpose.msra.mxu0 %v284
    %662 = vmatprep.subr.mxu0 0.0
    %663 = vmatpush1.xpose.msra.mxu0 %v287
    %664 = vmatprep.subr.mxu0 0.0
    %665 = vmatpush1.xpose.msra.mxu0 %v290
    %666 = vmatprep.subr.mxu0 0.0
    %667 = vmatpush1.xpose.msra.mxu0 %v293
    %668 = vmatprep.subr.mxu0 0.0
    %669 = vmatpush1.xpose.msra.mxu0 %v296
    %670 = vmatprep.subr.mxu0 0.0
    %671 = vmatpush1.xpose.msra.mxu0 %v299
    %672 = vmatprep.subr.mxu0 0.0
    %673 = vmatpush1.xpose.msra.mxu0 %v302
    %674 = vmatprep.subr.mxu0 0.0
    %675 = vmatpush1.xpose.msra.mxu0 %v305
    %676 = vmatprep.subr.mxu0 0.0
    %677 = vmatpush1.xpose.msra.mxu0 %v308
    %678 = vmatprep.subr.mxu0 0.0
    %679 = vmatpush1.xpose.msra.mxu0 %v311
    %680 = vmatprep.subr.mxu0 0.0
    %681 = vmatpush1.xpose.msra.mxu0 %v314
    %682 = vmatprep.subr.mxu0 0.0
    %683 = vmatpush1.xpose.msra.mxu0 %v317
    %684 = vmatprep.subr.mxu0 0.0
    %685 = vmatpush1.xpose.msra.mxu0 %v320
    %686 = vmatprep.subr.mxu0 0.0
    %687 = vmatpush1.xpose.msra.mxu0 %v323
    %688 = vmatprep.subr.mxu0 0.0
    %689 = vmatpush1.xpose.msra.mxu0 %v326
    %690 = vmatprep.subr.mxu0 0.0
    %691 = vmatpush1.xpose.msra.mxu0 %v329
    %692 = vmatprep.subr.mxu0 0.0
    %693 = vmatpush1.xpose.msra.mxu0 %v332
    %694 = vmatprep.subr.mxu0 0.0
    %695 = vmatpush1.xpose.msra.mxu0 %v335
    %696 = vmatprep.subr.mxu0 0.0
    %697 = vmatpush1.xpose.msra.mxu0 %v338
    %698 = vmatprep.subr.mxu0 0.0
    %699 = vmatpush1.xpose.msra.mxu0 %v341
    %700 = vmatprep.subr.mxu0 0.0
    %701 = vmatpush1.xpose.msra.mxu0 %v344
    %702 = vmatprep.subr.mxu0 0.0
    %703 = vmatpush1.xpose.msra.mxu0 %v347
    %704 = vmatprep.subr.mxu0 0.0
    %705 = vmatpush1.xpose.msra.mxu0 %v350
    %706 = vmatprep.subr.mxu0 0.0
    %707 = vmatpush1.xpose.msra.mxu0 %v353
    %708 = vmatprep.subr.mxu0 0.0
    %709 = vmatpush1.xpose.msra.mxu0 %v356
    %710 = vmatprep.subr.mxu0 0.0
    %711 = vmatpush1.xpose.msra.mxu0 %v359
    %712 = vmatprep.subr.mxu0 0.0
    %713 = vmatpush1.xpose.msra.mxu0 %v362
    %714 = vmatprep.subr.mxu0 0.0
    %715 = vmatpush1.xpose.msra.mxu0 %v365
    %716 = vmatprep.subr.mxu0 0.0
    %717 = vmatpush1.xpose.msra.mxu0 %v368
    %718 = vmatprep.subr.mxu0 0.0
    %719 = vmatpush1.xpose.msra.mxu0 %v371
    %720 = vmatprep.subr.mxu0 0.0
    %721 = vmatpush1.xpose.msra.mxu0 %v374
    %722 = vmatprep.subr.mxu0 0.0
    %723 = vmatpush1.xpose.msra.mxu0 %v377
    %724 = vmatprep.mubr.f32.mxu0 0.0
    %725 = vmatmul.mubr.f32.gmra.mrb[0].mxu0 %v176
    %v726 = vpop.f32.mrb[0].mxu0
    %v727 = vadd.f32 %v157, %v726
    %v728 = vpop.f32.mrb[0].mxu0
    %v729 = vadd.f32 %v157, %v728
    %730 = vmatprep.mubr.f32.mxu0 0.0
    %731 = vmatmul.mubr.f32.gmra.mrb[0].mxu0 %v179
    %v732 = vpop.f32.mrb[0].mxu0
    %v733 = vadd.f32 %v162, %v732
    %v734 = vpop.f32.mrb[0].mxu0
    %v735 = vadd.f32 %v162, %v734
    %736 = vmatprep.mubr.f32.mxu0 0.0
    %737 = vmatmul.mubr.f32.gmra.mrb[0].mxu0 %v182
    %v738 = vpop.f32.mrb[0].mxu0
    %v739 = vadd.f32 %v167, %v738
    %v740 = vpop.f32.mrb[0].mxu0
    %v741 = vadd.f32 %v167, %v740
    %742 = vmatprep.mubr.f32.mxu0 0.0
    %743 = vmatmul.mubr.f32.gmra.mrb[0].mxu0 %v185
    %v744 = vpop.f32.mrb[0].mxu0
    %v745 = vadd.f32 %v172, %v744
    %v746 = vpop.f32.mrb[0].mxu0
    %v747 = vadd.f32 %v172, %v746
    %748 = vdwg.mxu0
    %749 = vmatprep.subr.mxu0 0.0
    %750 = vmatpush1.xpose.msra.mxu0 %v380
    %751 = vmatprep.subr.mxu0 0.0
    %752 = vmatpush1.xpose.msra.mxu0 %v383
    %753 = vmatprep.subr.mxu0 0.0
    %754 = vmatpush1.xpose.msra.mxu0 %v386
    %755 = vmatprep.subr.mxu0 0.0
    %756 = vmatpush1.xpose.msra.mxu0 %v389
    %757 = vmatprep.subr.mxu0 0.0
    %758 = vmatpush1.xpose.msra.mxu0 %v392
    %759 = vmatprep.subr.mxu0 0.0
    %760 = vmatpush1.xpose.msra.mxu0 %v395
    %761 = vmatprep.subr.mxu0 0.0
    %762 = vmatpush1.xpose.msra.mxu0 %v398
    %763 = vmatprep.subr.mxu0 0.0
    %764 = vmatpush1.xpose.msra.mxu0 %v401
    %765 = vmatprep.subr.mxu0 0.0
    %766 = vmatpush1.xpose.msra.mxu0 %v404
    %767 = vmatprep.subr.mxu0 0.0
    %768 = vmatpush1.xpose.msra.mxu0 %v407
    %769 = vmatprep.subr.mxu0 0.0
    %770 = vmatpush1.xpose.msra.mxu0 %v410
    %771 = vmatprep.subr.mxu0 0.0
    %772 = vmatpush1.xpose.msra.mxu0 %v413
    %773 = vmatprep.subr.mxu0 0.0
    %774 = vmatpush1.xpose.msra.mxu0 %v416
    %775 = vmatprep.subr.mxu0 0.0
    %776 = vmatpush1.xpose.msra.mxu0 %v419
    %777 = vmatprep.subr.mxu0 0.0
    %778 = vmatpush1.xpose.msra.mxu0 %v422
    %779 = vmatprep.subr.mxu0 0.0
    %780 = vmatpush1.xpose.msra.mxu0 %v425
    %781 = vmatprep.subr.mxu0 0.0
    %782 = vmatpush1.xpose.msra.mxu0 %v428
    %783 = vmatprep.subr.mxu0 0.0
    %784 = vmatpush1.xpose.msra.mxu0 %v431
    %785 = vmatprep.subr.mxu0 0.0
    %786 = vmatpush1.xpose.msra.mxu0 %v434
    %787 = vmatprep.subr.mxu0 0.0
    %788 = vmatpush1.xpose.msra.mxu0 %v437
    %789 = vmatprep.subr.mxu0 0.0
    %790 = vmatpush1.xpose.msra.mxu0 %v440
    %791 = vmatprep.subr.mxu0 0.0
    %792 = vmatpush1.xpose.msra.mxu0 %v443
    %793 = vmatprep.subr.mxu0 0.0
    %794 = vmatpush1.xpose.msra.mxu0 %v446
    %795 = vmatprep.subr.mxu0 0.0
    %796 = vmatpush1.xpose.msra.mxu0 %v449
    %797 = vmatprep.subr.mxu0 0.0
    %798 = vmatpush1.xpose.msra.mxu0 %v452
    %799 = vmatprep.subr.mxu0 0.0
    %800 = vmatpush1.xpose.msra.mxu0 %v455
    %801 = vmatprep.subr.mxu0 0.0
    %802 = vmatpush1.xpose.msra.mxu0 %v458
    %803 = vmatprep.subr.mxu0 0.0
    %804 = vmatpush1.xpose.msra.mxu0 %v461
    %805 = vmatprep.subr.mxu0 0.0
    %806 = vmatpush1.xpose.msra.mxu0 %v464
    %807 = vmatprep.subr.mxu0 0.0
    %808 = vmatpush1.xpose.msra.mxu0 %v467
    %809 = vmatprep.subr.mxu0 0.0
    %810 = vmatpush1.xpose.msra.mxu0 %v470
    %811 = vmatprep.subr.mxu0 0.0
    %812 = vmatpush1.xpose.msra.mxu0 %v473
    %813 = vmatprep.mubr.f32.mxu0 0.0
    %814 = vmatmul.mubr.f32.gmra.mrb[0].mxu0 %v176
    %v815 = vpop.f32.mrb[0].mxu0
    %v816 = vadd.f32 %v157, %v815
    %v817 = vpop.f32.mrb[0].mxu0
    %v818 = vadd.f32 %v157, %v817
    %819 = vmatprep.mubr.f32.mxu0 0.0
    %820 = vmatmul.mubr.f32.gmra.mrb[0].mxu0 %v179
    %v821 = vpop.f32.mrb[0].mxu0
    %v822 = vadd.f32 %v162, %v821
    %v823 = vpop.f32.mrb[0].mxu0
    %v824 = vadd.f32 %v162, %v823
    %825 = vmatprep.mubr.f32.mxu0 0.0
    %826 = vmatmul.mubr.f32.gmra.mrb[0].mxu0 %v182
    %v827 = vpop.f32.mrb[0].mxu0
    %v828 = vadd.f32 %v167, %v827
    %v829 = vpop.f32.mrb[0].mxu0
    %v830 = vadd.f32 %v167, %v829
    %831 = vmatprep.mubr.f32.mxu0 0.0
    %832 = vmatmul.mubr.f32.gmra.mrb[0].mxu0 %v185
    %v833 = vpop.f32.mrb[0].mxu0
    %v834 = vadd.f32 %v172, %v833
    %v835 = vpop.f32.mrb[0].mxu0
    %v836 = vadd.f32 %v172, %v835
    %837 = vdwg.mxu0
    %838 = vmatprep.subr.mxu0 0.0
    %839 = vmatpush1.xpose.msra.mxu0 %v476
    %840 = vmatprep.subr.mxu0 0.0
    %841 = vmatpush1.xpose.msra.mxu0 %v479
    %842 = vmatprep.subr.mxu0 0.0
    %843 = vmatpush1.xpose.msra.mxu0 %v482
    %844 = vmatprep.subr.mxu0 0.0
    %845 = vmatpush1.xpose.msra.mxu0 %v485
    %846 = vmatprep.subr.mxu0 0.0
    %847 = vmatpush1.xpose.msra.mxu0 %v488
    %848 = vmatprep.subr.mxu0 0.0
    %849 = vmatpush1.xpose.msra.mxu0 %v491
    %850 = vmatprep.subr.mxu0 0.0
    %851 = vmatpush1.xpose.msra.mxu0 %v494
    %852 = vmatprep.subr.mxu0 0.0
    %853 = vmatpush1.xpose.msra.mxu0 %v497
    %854 = vmatprep.subr.mxu0 0.0
    %855 = vmatpush1.xpose.msra.mxu0 %v500
    %856 = vmatprep.subr.mxu0 0.0
    %857 = vmatpush1.xpose.msra.mxu0 %v503
    %858 = vmatprep.subr.mxu0 0.0
    %859 = vmatpush1.xpose.msra.mxu0 %v506
    %860 = vmatprep.subr.mxu0 0.0
    %861 = vmatpush1.xpose.msra.mxu0 %v509
    %862 = vmatprep.subr.mxu0 0.0
    %863 = vmatpush1.xpose.msra.mxu0 %v512
    %864 = vmatprep.subr.mxu0 0.0
    %865 = vmatpush1.xpose.msra.mxu0 %v515
    %866 = vmatprep.subr.mxu0 0.0
    %867 = vmatpush1.xpose.msra.mxu0 %v518
    %868 = vmatprep.subr.mxu0 0.0
    %869 = vmatpush1.xpose.msra.mxu0 %v521
    %870 = vmatprep.subr.mxu0 0.0
    %871 = vmatpush1.xpose.msra.mxu0 %v524
    %872 = vmatprep.subr.mxu0 0.0
    %873 = vmatpush1.xpose.msra.mxu0 %v527
    %874 = vmatprep.subr.mxu0 0.0
    %875 = vmatpush1.xpose.msra.mxu0 %v530
    %876 = vmatprep.subr.mxu0 0.0
    %877 = vmatpush1.xpose.msra.mxu0 %v533
    %878 = vmatprep.subr.mxu0 0.0
    %879 = vmatpush1.xpose.msra.mxu0 %v536
    %880 = vmatprep.subr.mxu0 0.0
    %881 = vmatpush1.xpose.msra.mxu0 %v539
    %882 = vmatprep.subr.mxu0 0.0
    %883 = vmatpush1.xpose.msra.mxu0 %v542
    %884 = vmatprep.subr.mxu0 0.0
    %885 = vmatpush1.xpose.msra.mxu0 %v545
    %886 = vmatprep.subr.mxu0 0.0
    %887 = vmatpush1.xpose.msra.mxu0 %v548
    %888 = vmatprep.subr.mxu0 0.0
    %889 = vmatpush1.xpose.msra.mxu0 %v551
    %890 = vmatprep.subr.mxu0 0.0
    %891 = vmatpush1.xpose.msra.mxu0 %v554
    %892 = vmatprep.subr.mxu0 0.0
    %893 = vmatpush1.xpose.msra.mxu0 %v557
    %894 = vmatprep.subr.mxu0 0.0
    %895 = vmatpush1.xpose.msra.mxu0 %v560
    %896 = vmatprep.subr.mxu0 0.0
    %897 = vmatpush1.xpose.msra.mxu0 %v563
    %898 = vmatprep.subr.mxu0 0.0
    %899 = vmatpush1.xpose.msra.mxu0 %v566
    %900 = vmatprep.subr.mxu0 0.0
    %901 = vmatpush1.xpose.msra.mxu0 %v569
    %902 = vmatprep.mubr.f32.mxu0 0.0
    %903 = vmatmul.mubr.f32.gmra.mrb[0].mxu0 %v176
    %v904 = vpop.f32.mrb[0].mxu0
    %v905 = vadd.f32 %v157, %v904
    %v906 = vpop.f32.mrb[0].mxu0
    %v907 = vadd.f32 %v157, %v906
    %908 = vmatprep.mubr.f32.mxu0 0.0
    %909 = vmatmul.mubr.f32.gmra.mrb[0].mxu0 %v179
    %v910 = vpop.f32.mrb[0].mxu0
    %v911 = vadd.f32 %v162, %v910
    %v912 = vpop.f32.mrb[0].mxu0
    %v913 = vadd.f32 %v162, %v912
    %914 = vmatprep.mubr.f32.mxu0 0.0
    %915 = vmatmul.mubr.f32.gmra.mrb[0].mxu0 %v182
    %v916 = vpop.f32.mrb[0].mxu0
    %v917 = vadd.f32 %v167, %v916
    %v918 = vpop.f32.mrb[0].mxu0
    %v919 = vadd.f32 %v167, %v918
    %920 = vmatprep.mubr.f32.mxu0 0.0
    %921 = vmatmul.mubr.f32.gmra.mrb[0].mxu0 %v185
    %v922 = vpop.f32.mrb[0].mxu0
    %v923 = vadd.f32 %v172, %v922
    %v924 = vpop.f32.mrb[0].mxu0
    %v925 = vadd.f32 %v172, %v924
    %926 = vdwg.mxu0
    %v927 = vmax.f32 %v638, 0.0
    %v928 = vmax.f32 %v640, 0.0
    %v929 = vmax.f32 %v727, 0.0
    %v930 = vmax.f32 %v729, 0.0
    %v931 = vmax.f32 %v816, 0.0
    %v932 = vmax.f32 %v818, 0.0
    %v933 = vmax.f32 %v905, 0.0
    %v934 = vmax.f32 %v907, 0.0
    %v935 = vmax.f32 %v644, 0.0
    %v936 = vmax.f32 %v646, 0.0
    %v937 = vmax.f32 %v733, 0.0
    %v938 = vmax.f32 %v735, 0.0
    %v939 = vmax.f32 %v822, 0.0
    %v940 = vmax.f32 %v824, 0.0
    %v941 = vmax.f32 %v911, 0.0
    %v942 = vmax.f32 %v913, 0.0
    %v943 = vmax.f32 %v650, 0.0
    %v944 = vmax.f32 %v652, 0.0
    %v945 = vmax.f32 %v739, 0.0
    %v946 = vmax.f32 %v741, 0.0
    %v947 = vmax.f32 %v828, 0.0
    %v948 = vmax.f32 %v830, 0.0
    %v949 = vmax.f32 %v917, 0.0
    %v950 = vmax.f32 %v919, 0.0
    %v951 = vmax.f32 %v656, 0.0
    %v952 = vmax.f32 %v658, 0.0
    %v953 = vmax.f32 %v745, 0.0
    %v954 = vmax.f32 %v747, 0.0
    %v955 = vmax.f32 %v834, 0.0
    %v956 = vmax.f32 %v836, 0.0
    %v957 = vmax.f32 %v923, 0.0
    %v958 = vmax.f32 %v925, 0.0
    %959 = vset.pattern.permute.xlu0 1
    %960 = vperm.xlu0 %959, %v21
    %v961 = vpop.permute.xlu0 %960
    %963 = vset.pattern.permute.xlu0 1
    %964 = vperm.xlu0 %963, %v22
    %v965 = vpop.permute.xlu0 %964
    %967 = vset.pattern.permute.xlu0 1
    %968 = vperm.xlu0 %967, %v23
    %v969 = vpop.permute.xlu0 %968
    %971 = vset.pattern.permute.xlu0 1
    %972 = vperm.xlu0 %971, %v24
    %v973 = vpop.permute.xlu0 %972
    %vm975 = vcmask 261120
    %v977 = vsel %vm975, %v16, 0
    %v980 = vsel %vm975, %v17, 0
    %v983 = vsel %vm975, %v18, 0
    %v986 = vsel %vm975, %v19, 0
    %988 = vmatprep.subr.mxu0 %v928
    %989 = vmatpush1.msra.mxu0 %v927
    %990 = vmatprep.subr.mxu0 %v936
    %991 = vmatpush1.msra.mxu0 %v935
    %992 = vmatprep.subr.mxu0 %v944
    %993 = vmatpush1.msra.mxu0 %v943
    %994 = vmatprep.subr.mxu0 %v952
    %995 = vmatpush1.msra.mxu0 %v951
    %996 = vmatprep.subr.mxu0 0.0
    %997 = vmatpush1.msra.mxu0 0.0
    %998 = vmatprep.subr.mxu0 0.0
    %999 = vmatpush1.msra.mxu0 0.0
    %1000 = vmatprep.subr.mxu0 0.0
    %1001 = vmatpush1.msra.mxu0 0.0
    %1002 = vmatprep.subr.mxu0 0.0
    %1003 = vmatpush1.msra.mxu0 0.0
    %1004 = vmatprep.subr.mxu0 0.0
    %1005 = vmatpush1.msra.mxu0 0.0
    %1006 = vmatprep.subr.mxu0 0.0
    %1007 = vmatpush1.msra.mxu0 0.0
    %1008 = vmatprep.subr.mxu0 0.0
    %1009 = vmatpush1.msra.mxu0 0.0
    %1010 = vmatprep.subr.mxu0 0.0
    %1011 = vmatpush1.msra.mxu0 0.0
    %1012 = vmatprep.subr.mxu0 0.0
    %1013 = vmatpush1.msra.mxu0 0.0
    %1014 = vmatprep.subr.mxu0 0.0
    %1015 = vmatpush1.msra.mxu0 0.0
    %1016 = vmatprep.subr.mxu0 0.0
    %1017 = vmatpush1.msra.mxu0 0.0
    %1018 = vmatprep.subr.mxu0 0.0
    %1019 = vmatpush1.msra.mxu0 0.0
    %1020 = vmatprep.subr.mxu0 0.0
    %1021 = vmatpush1.msra.mxu0 0.0
    %1022 = vmatprep.subr.mxu0 0.0
    %1023 = vmatpush1.msra.mxu0 0.0
    %1024 = vmatprep.subr.mxu0 0.0
    %1025 = vmatpush1.msra.mxu0 0.0
    %1026 = vmatprep.subr.mxu0 0.0
    %1027 = vmatpush1.msra.mxu0 0.0
    %1028 = vmatprep.subr.mxu0 0.0
    %1029 = vmatpush1.msra.mxu0 0.0
    %1030 = vmatprep.subr.mxu0 0.0
    %1031 = vmatpush1.msra.mxu0 0.0
    %1032 = vmatprep.subr.mxu0 0.0
    %1033 = vmatpush1.msra.mxu0 0.0
    %1034 = vmatprep.subr.mxu0 0.0
    %1035 = vmatpush1.msra.mxu0 0.0
    %1036 = vmatprep.subr.mxu0 0.0
    %1037 = vmatpush1.msra.mxu0 0.0
    %1038 = vmatprep.subr.mxu0 0.0
    %1039 = vmatpush1.msra.mxu0 0.0
    %1040 = vmatprep.subr.mxu0 0.0
    %1041 = vmatpush1.msra.mxu0 0.0
    %1042 = vmatprep.subr.mxu0 0.0
    %1043 = vmatpush1.msra.mxu0 0.0
    %1044 = vmatprep.subr.mxu0 0.0
    %1045 = vmatpush1.msra.mxu0 0.0
    %1046 = vmatprep.subr.mxu0 0.0
    %1047 = vmatpush1.msra.mxu0 0.0
    %1048 = vmatprep.subr.mxu0 0.0
    %1049 = vmatpush1.msra.mxu0 0.0
    %1050 = vmatprep.subr.mxu0 0.0
    %1051 = vmatpush1.msra.mxu0 0.0
    %1052 = vmatprep.mubr.f32.mxu0 0.0
    %1053 = vmatmul.mubr.f32.gmra.mrb[0].mxu0 %v977
    %v1054 = vpop.f32.mrb[0].mxu0
    %v1055 = vadd.f32 %v961, %v1054
    %v1056 = vpop.f32.mrb[0].mxu0
    %v1057 = vadd.f32 %v961, %v1056
    %1058 = vmatprep.mubr.f32.mxu0 0.0
    %1059 = vmatmul.mubr.f32.gmra.mrb[0].mxu0 %v980
    %v1060 = vpop.f32.mrb[0].mxu0
    %v1061 = vadd.f32 %v965, %v1060
    %v1062 = vpop.f32.mrb[0].mxu0
    %v1063 = vadd.f32 %v965, %v1062
    %1064 = vmatprep.mubr.f32.mxu0 0.0
    %1065 = vmatmul.mubr.f32.gmra.mrb[0].mxu0 %v983
    %v1066 = vpop.f32.mrb[0].mxu0
    %v1067 = vadd.f32 %v969, %v1066
    %v1068 = vpop.f32.mrb[0].mxu0
    %v1069 = vadd.f32 %v969, %v1068
    %1070 = vmatprep.mubr.f32.mxu0 0.0
    %1071 = vmatmul.mubr.f32.gmra.mrb[0].mxu0 %v986
    %v1072 = vpop.f32.mrb[0].mxu0
    %v1073 = vadd.f32 %v973, %v1072
    %v1074 = vpop.f32.mrb[0].mxu0
    %v1075 = vadd.f32 %v973, %v1074
    %1076 = vdwg.mxu0
    %1077 = vmatprep.subr.mxu0 %v930
    %1078 = vmatpush1.msra.mxu0 %v929
    %1079 = vmatprep.subr.mxu0 %v938
    %1080 = vmatpush1.msra.mxu0 %v937
    %1081 = vmatprep.subr.mxu0 %v946
    %1082 = vmatpush1.msra.mxu0 %v945
    %1083 = vmatprep.subr.mxu0 %v954
    %1084 = vmatpush1.msra.mxu0 %v953
    %1085 = vmatprep.subr.mxu0 0.0
    %1086 = vmatpush1.msra.mxu0 0.0
    %1087 = vmatprep.subr.mxu0 0.0
    %1088 = vmatpush1.msra.mxu0 0.0
    %1089 = vmatprep.subr.mxu0 0.0
    %1090 = vmatpush1.msra.mxu0 0.0
    %1091 = vmatprep.subr.mxu0 0.0
    %1092 = vmatpush1.msra.mxu0 0.0
    %1093 = vmatprep.subr.mxu0 0.0
    %1094 = vmatpush1.msra.mxu0 0.0
    %1095 = vmatprep.subr.mxu0 0.0
    %1096 = vmatpush1.msra.mxu0 0.0
    %1097 = vmatprep.subr.mxu0 0.0
    %1098 = vmatpush1.msra.mxu0 0.0
    %1099 = vmatprep.subr.mxu0 0.0
    %1100 = vmatpush1.msra.mxu0 0.0
    %1101 = vmatprep.subr.mxu0 0.0
    %1102 = vmatpush1.msra.mxu0 0.0
    %1103 = vmatprep.subr.mxu0 0.0
    %1104 = vmatpush1.msra.mxu0 0.0
    %1105 = vmatprep.subr.mxu0 0.0
    %1106 = vmatpush1.msra.mxu0 0.0
    %1107 = vmatprep.subr.mxu0 0.0
    %1108 = vmatpush1.msra.mxu0 0.0
    %1109 = vmatprep.subr.mxu0 0.0
    %1110 = vmatpush1.msra.mxu0 0.0
    %1111 = vmatprep.subr.mxu0 0.0
    %1112 = vmatpush1.msra.mxu0 0.0
    %1113 = vmatprep.subr.mxu0 0.0
    %1114 = vmatpush1.msra.mxu0 0.0
    %1115 = vmatprep.subr.mxu0 0.0
    %1116 = vmatpush1.msra.mxu0 0.0
    %1117 = vmatprep.subr.mxu0 0.0
    %1118 = vmatpush1.msra.mxu0 0.0
    %1119 = vmatprep.subr.mxu0 0.0
    %1120 = vmatpush1.msra.mxu0 0.0
    %1121 = vmatprep.subr.mxu0 0.0
    %1122 = vmatpush1.msra.mxu0 0.0
    %1123 = vmatprep.subr.mxu0 0.0
    %1124 = vmatpush1.msra.mxu0 0.0
    %1125 = vmatprep.subr.mxu0 0.0
    %1126 = vmatpush1.msra.mxu0 0.0
    %1127 = vmatprep.subr.mxu0 0.0
    %1128 = vmatpush1.msra.mxu0 0.0
    %1129 = vmatprep.subr.mxu0 0.0
    %1130 = vmatpush1.msra.mxu0 0.0
    %1131 = vmatprep.subr.mxu0 0.0
    %1132 = vmatpush1.msra.mxu0 0.0
    %1133 = vmatprep.subr.mxu0 0.0
    %1134 = vmatpush1.msra.mxu0 0.0
    %1135 = vmatprep.subr.mxu0 0.0
    %1136 = vmatpush1.msra.mxu0 0.0
    %1137 = vmatprep.subr.mxu0 0.0
    %1138 = vmatpush1.msra.mxu0 0.0
    %1139 = vmatprep.subr.mxu0 0.0
    %1140 = vmatpush1.msra.mxu0 0.0
    %1141 = vmatprep.mubr.f32.mxu0 0.0
    %1142 = vmatmul.mubr.f32.gmra.mrb[0].mxu0 %v977
    %v1143 = vpop.f32.mrb[0].mxu0
    %v1144 = vadd.f32 %v961, %v1143
    %v1145 = vpop.f32.mrb[0].mxu0
    %v1146 = vadd.f32 %v961, %v1145
    %1147 = vmatprep.mubr.f32.mxu0 0.0
    %1148 = vmatmul.mubr.f32.gmra.mrb[0].mxu0 %v980
    %v1149 = vpop.f32.mrb[0].mxu0
    %v1150 = vadd.f32 %v965, %v1149
    %v1151 = vpop.f32.mrb[0].mxu0
    %v1152 = vadd.f32 %v965, %v1151
    %1153 = vmatprep.mubr.f32.mxu0 0.0
    %1154 = vmatmul.mubr.f32.gmra.mrb[0].mxu0 %v983
    %v1155 = vpop.f32.mrb[0].mxu0
    %v1156 = vadd.f32 %v969, %v1155
    %v1157 = vpop.f32.mrb[0].mxu0
    %v1158 = vadd.f32 %v969, %v1157
    %1159 = vmatprep.mubr.f32.mxu0 0.0
    %1160 = vmatmul.mubr.f32.gmra.mrb[0].mxu0 %v986
    %v1161 = vpop.f32.mrb[0].mxu0
    %v1162 = vadd.f32 %v973, %v1161
    %v1163 = vpop.f32.mrb[0].mxu0
    %v1164 = vadd.f32 %v973, %v1163
    %1165 = vdwg.mxu0
    %1166 = vmatprep.subr.mxu0 %v932
    %1167 = vmatpush1.msra.mxu0 %v931
    %1168 = vmatprep.subr.mxu0 %v940
    %1169 = vmatpush1.msra.mxu0 %v939
    %1170 = vmatprep.subr.mxu0 %v948
    %1171 = vmatpush1.msra.mxu0 %v947
    %1172 = vmatprep.subr.mxu0 %v956
    %1173 = vmatpush1.msra.mxu0 %v955
    %1174 = vmatprep.subr.mxu0 0.0
    %1175 = vmatpush1.msra.mxu0 0.0
    %1176 = vmatprep.subr.mxu0 0.0
    %1177 = vmatpush1.msra.mxu0 0.0
    %1178 = vmatprep.subr.mxu0 0.0
    %1179 = vmatpush1.msra.mxu0 0.0
    %1180 = vmatprep.subr.mxu0 0.0
    %1181 = vmatpush1.msra.mxu0 0.0
    %1182 = vmatprep.subr.mxu0 0.0
    %1183 = vmatpush1.msra.mxu0 0.0
    %1184 = vmatprep.subr.mxu0 0.0
    %1185 = vmatpush1.msra.mxu0 0.0
    %1186 = vmatprep.subr.mxu0 0.0
    %1187 = vmatpush1.msra.mxu0 0.0
    %1188 = vmatprep.subr.mxu0 0.0
    %1189 = vmatpush1.msra.mxu0 0.0
    %1190 = vmatprep.subr.mxu0 0.0
    %1191 = vmatpush1.msra.mxu0 0.0
    %1192 = vmatprep.subr.mxu0 0.0
    %1193 = vmatpush1.msra.mxu0 0.0
    %1194 = vmatprep.subr.mxu0 0.0
    %1195 = vmatpush1.msra.mxu0 0.0
    %1196 = vmatprep.subr.mxu0 0.0
    %1197 = vmatpush1.msra.mxu0 0.0
    %1198 = vmatprep.subr.mxu0 0.0
    %1199 = vmatpush1.msra.mxu0 0.0
    %1200 = vmatprep.subr.mxu0 0.0
    %1201 = vmatpush1.msra.mxu0 0.0
    %1202 = vmatprep.subr.mxu0 0.0
    %1203 = vmatpush1.msra.mxu0 0.0
    %1204 = vmatprep.subr.mxu0 0.0
    %1205 = vmatpush1.msra.mxu0 0.0
    %1206 = vmatprep.subr.mxu0 0.0
    %1207 = vmatpush1.msra.mxu0 0.0
    %1208 = vmatprep.subr.mxu0 0.0
    %1209 = vmatpush1.msra.mxu0 0.0
    %1210 = vmatprep.subr.mxu0 0.0
    %1211 = vmatpush1.msra.mxu0 0.0
    %1212 = vmatprep.subr.mxu0 0.0
    %1213 = vmatpush1.msra.mxu0 0.0
    %1214 = vmatprep.subr.mxu0 0.0
    %1215 = vmatpush1.msra.mxu0 0.0
    %1216 = vmatprep.subr.mxu0 0.0
    %1217 = vmatpush1.msra.mxu0 0.0
    %1218 = vmatprep.subr.mxu0 0.0
    %1219 = vmatpush1.msra.mxu0 0.0
    %1220 = vmatprep.subr.mxu0 0.0
    %1221 = vmatpush1.msra.mxu0 0.0
    %1222 = vmatprep.subr.mxu0 0.0
    %1223 = vmatpush1.msra.mxu0 0.0
    %1224 = vmatprep.subr.mxu0 0.0
    %1225 = vmatpush1.msra.mxu0 0.0
    %1226 = vmatprep.subr.mxu0 0.0
    %1227 = vmatpush1.msra.mxu0 0.0
    %1228 = vmatprep.subr.mxu0 0.0
    %1229 = vmatpush1.msra.mxu0 0.0
    %1230 = vmatprep.mubr.f32.mxu0 0.0
    %1231 = vmatmul.mubr.f32.gmra.mrb[0].mxu0 %v977
    %v1232 = vpop.f32.mrb[0].mxu0
    %v1233 = vadd.f32 %v961, %v1232
    %v1234 = vpop.f32.mrb[0].mxu0
    %v1235 = vadd.f32 %v961, %v1234
    %1236 = vmatprep.mubr.f32.mxu0 0.0
    %1237 = vmatmul.mubr.f32.gmra.mrb[0].mxu0 %v980
    %v1238 = vpop.f32.mrb[0].mxu0
    %v1239 = vadd.f32 %v965, %v1238
    %v1240 = vpop.f32.mrb[0].mxu0
    %v1241 = vadd.f32 %v965, %v1240
    %1242 = vmatprep.mubr.f32.mxu0 0.0
    %1243 = vmatmul.mubr.f32.gmra.mrb[0].mxu0 %v983
    %v1244 = vpop.f32.mrb[0].mxu0
    %v1245 = vadd.f32 %v969, %v1244
    %v1246 = vpop.f32.mrb[0].mxu0
    %v1247 = vadd.f32 %v969, %v1246
    %1248 = vmatprep.mubr.f32.mxu0 0.0
    %1249 = vmatmul.mubr.f32.gmra.mrb[0].mxu0 %v986
    %v1250 = vpop.f32.mrb[0].mxu0
    %v1251 = vadd.f32 %v973, %v1250
    %v1252 = vpop.f32.mrb[0].mxu0
    %v1253 = vadd.f32 %v973, %v1252
    %1254 = vdwg.mxu0
    %1255 = vmatprep.subr.mxu0 %v934
    %1256 = vmatpush1.msra.mxu0 %v933
    %1257 = vmatprep.subr.mxu0 %v942
    %1258 = vmatpush1.msra.mxu0 %v941
    %1259 = vmatprep.subr.mxu0 %v950
    %1260 = vmatpush1.msra.mxu0 %v949
    %1261 = vmatprep.subr.mxu0 %v958
    %1262 = vmatpush1.msra.mxu0 %v957
    %1263 = vmatprep.subr.mxu0 0.0
    %1264 = vmatpush1.msra.mxu0 0.0
    %1265 = vmatprep.subr.mxu0 0.0
    %1266 = vmatpush1.msra.mxu0 0.0
    %1267 = vmatprep.subr.mxu0 0.0
    %1268 = vmatpush1.msra.mxu0 0.0
    %1269 = vmatprep.subr.mxu0 0.0
    %1270 = vmatpush1.msra.mxu0 0.0
    %1271 = vmatprep.subr.mxu0 0.0
    %1272 = vmatpush1.msra.mxu0 0.0
    %1273 = vmatprep.subr.mxu0 0.0
    %1274 = vmatpush1.msra.mxu0 0.0
    %1275 = vmatprep.subr.mxu0 0.0
    %1276 = vmatpush1.msra.mxu0 0.0
    %1277 = vmatprep.subr.mxu0 0.0
    %1278 = vmatpush1.msra.mxu0 0.0
    %1279 = vmatprep.subr.mxu0 0.0
    %1280 = vmatpush1.msra.mxu0 0.0
    %1281 = vmatprep.subr.mxu0 0.0
    %1282 = vmatpush1.msra.mxu0 0.0
    %1283 = vmatprep.subr.mxu0 0.0
    %1284 = vmatpush1.msra.mxu0 0.0
    %1285 = vmatprep.subr.mxu0 0.0
    %1286 = vmatpush1.msra.mxu0 0.0
    %1287 = vmatprep.subr.mxu0 0.0
    %1288 = vmatpush1.msra.mxu0 0.0
    %1289 = vmatprep.subr.mxu0 0.0
    %1290 = vmatpush1.msra.mxu0 0.0
    %1291 = vmatprep.subr.mxu0 0.0
    %1292 = vmatpush1.msra.mxu0 0.0
    %1293 = vmatprep.subr.mxu0 0.0
    %1294 = vmatpush1.msra.mxu0 0.0
    %1295 = vmatprep.subr.mxu0 0.0
    %1296 = vmatpush1.msra.mxu0 0.0
    %1297 = vmatprep.subr.mxu0 0.0
    %1298 = vmatpush1.msra.mxu0 0.0
    %1299 = vmatprep.subr.mxu0 0.0
    %1300 = vmatpush1.msra.mxu0 0.0
    %1301 = vmatprep.subr.mxu0 0.0
    %1302 = vmatpush1.msra.mxu0 0.0
    %1303 = vmatprep.subr.mxu0 0.0
    %1304 = vmatpush1.msra.mxu0 0.0
    %1305 = vmatprep.subr.mxu0 0.0
    %1306 = vmatpush1.msra.mxu0 0.0
    %1307 = vmatprep.subr.mxu0 0.0
    %1308 = vmatpush1.msra.mxu0 0.0
    %1309 = vmatprep.subr.mxu0 0.0
    %1310 = vmatpush1.msra.mxu0 0.0
    %1311 = vmatprep.subr.mxu0 0.0
    %1312 = vmatpush1.msra.mxu0 0.0
    %1313 = vmatprep.subr.mxu0 0.0
    %1314 = vmatpush1.msra.mxu0 0.0
    %1315 = vmatprep.subr.mxu0 0.0
    %1316 = vmatpush1.msra.mxu0 0.0
    %1317 = vmatprep.subr.mxu0 0.0
    %1318 = vmatpush1.msra.mxu0 0.0
    %1319 = vmatprep.mubr.f32.mxu0 0.0
    %1320 = vmatmul.mubr.f32.gmra.mrb[0].mxu0 %v977
    %v1321 = vpop.f32.mrb[0].mxu0
    %v1322 = vadd.f32 %v961, %v1321
    %v1323 = vpop.f32.mrb[0].mxu0
    %v1324 = vadd.f32 %v961, %v1323
    %1325 = vmatprep.mubr.f32.mxu0 0.0
    %1326 = vmatmul.mubr.f32.gmra.mrb[0].mxu0 %v980
    %v1327 = vpop.f32.mrb[0].mxu0
    %v1328 = vadd.f32 %v965, %v1327
    %v1329 = vpop.f32.mrb[0].mxu0
    %v1330 = vadd.f32 %v965, %v1329
    %1331 = vmatprep.mubr.f32.mxu0 0.0
    %1332 = vmatmul.mubr.f32.gmra.mrb[0].mxu0 %v983
    %v1333 = vpop.f32.mrb[0].mxu0
    %v1334 = vadd.f32 %v969, %v1333
    %v1335 = vpop.f32.mrb[0].mxu0
    %v1336 = vadd.f32 %v969, %v1335
    %1337 = vmatprep.mubr.f32.mxu0 0.0
    %1338 = vmatmul.mubr.f32.gmra.mrb[0].mxu0 %v986
    %v1339 = vpop.f32.mrb[0].mxu0
    %v1340 = vadd.f32 %v973, %v1339
    %v1341 = vpop.f32.mrb[0].mxu0
    %v1342 = vadd.f32 %v973, %v1341
    %1343 = vdwg.mxu0
    %v1344 = vmax.f32 %v1055, 0.0
    %v1345 = vmax.f32 %v1057, 0.0
    %v1346 = vmax.f32 %v1144, 0.0
    %v1347 = vmax.f32 %v1146, 0.0
    %v1348 = vmax.f32 %v1233, 0.0
    %v1349 = vmax.f32 %v1235, 0.0
    %v1350 = vmax.f32 %v1322, 0.0
    %v1351 = vmax.f32 %v1324, 0.0
    %v1352 = vmax.f32 %v1061, 0.0
    %v1353 = vmax.f32 %v1063, 0.0
    %v1354 = vmax.f32 %v1150, 0.0
    %v1355 = vmax.f32 %v1152, 0.0
    %v1356 = vmax.f32 %v1239, 0.0
    %v1357 = vmax.f32 %v1241, 0.0
    %v1358 = vmax.f32 %v1328, 0.0
    %v1359 = vmax.f32 %v1330, 0.0
    %v1360 = vmax.f32 %v1067, 0.0
    %v1361 = vmax.f32 %v1069, 0.0
    %v1362 = vmax.f32 %v1156, 0.0
    %v1363 = vmax.f32 %v1158, 0.0
    %v1364 = vmax.f32 %v1245, 0.0
    %v1365 = vmax.f32 %v1247, 0.0
    %v1366 = vmax.f32 %v1334, 0.0
    %v1367 = vmax.f32 %v1336, 0.0
    %v1368 = vmax.f32 %v1073, 0.0
    %v1369 = vmax.f32 %v1075, 0.0
    %v1370 = vmax.f32 %v1162, 0.0
    %v1371 = vmax.f32 %v1164, 0.0
    %v1372 = vmax.f32 %v1251, 0.0
    %v1373 = vmax.f32 %v1253, 0.0
    %v1374 = vmax.f32 %v1340, 0.0
    %v1375 = vmax.f32 %v1342, 0.0
    %1377 = vset.pattern.permute.xlu0 2
    %1378 = vperm.xlu0 %1377, %v25
    %v1379 = vpop.permute.xlu0 %1378
    %v1382 = vsel %vm975, %v20, 0
    %1384 = vmatprep.subr.mxu0 %v1345
    %1385 = vmatpush1.msra.mxu0 %v1344
    %1386 = vmatprep.subr.mxu0 %v1353
    %1387 = vmatpush1.msra.mxu0 %v1352
    %1388 = vmatprep.subr.mxu0 %v1361
    %1389 = vmatpush1.msra.mxu0 %v1360
    %1390 = vmatprep.subr.mxu0 %v1369
    %1391 = vmatpush1.msra.mxu0 %v1368
    %1392 = vmatprep.subr.mxu0 0.0
    %1393 = vmatpush1.msra.mxu0 0.0
    %1394 = vmatprep.subr.mxu0 0.0
    %1395 = vmatpush1.msra.mxu0 0.0
    %1396 = vmatprep.subr.mxu0 0.0
    %1397 = vmatpush1.msra.mxu0 0.0
    %1398 = vmatprep.subr.mxu0 0.0
    %1399 = vmatpush1.msra.mxu0 0.0
    %1400 = vmatprep.subr.mxu0 0.0
    %1401 = vmatpush1.msra.mxu0 0.0
    %1402 = vmatprep.subr.mxu0 0.0
    %1403 = vmatpush1.msra.mxu0 0.0
    %1404 = vmatprep.subr.mxu0 0.0
    %1405 = vmatpush1.msra.mxu0 0.0
    %1406 = vmatprep.subr.mxu0 0.0
    %1407 = vmatpush1.msra.mxu0 0.0
    %1408 = vmatprep.subr.mxu0 0.0
    %1409 = vmatpush1.msra.mxu0 0.0
    %1410 = vmatprep.subr.mxu0 0.0
    %1411 = vmatpush1.msra.mxu0 0.0
    %1412 = vmatprep.subr.mxu0 0.0
    %1413 = vmatpush1.msra.mxu0 0.0
    %1414 = vmatprep.subr.mxu0 0.0
    %1415 = vmatpush1.msra.mxu0 0.0
    %1416 = vmatprep.subr.mxu0 0.0
    %1417 = vmatpush1.msra.mxu0 0.0
    %1418 = vmatprep.subr.mxu0 0.0
    %1419 = vmatpush1.msra.mxu0 0.0
    %1420 = vmatprep.subr.mxu0 0.0
    %1421 = vmatpush1.msra.mxu0 0.0
    %1422 = vmatprep.subr.mxu0 0.0
    %1423 = vmatpush1.msra.mxu0 0.0
    %1424 = vmatprep.subr.mxu0 0.0
    %1425 = vmatpush1.msra.mxu0 0.0
    %1426 = vmatprep.subr.mxu0 0.0
    %1427 = vmatpush1.msra.mxu0 0.0
    %1428 = vmatprep.subr.mxu0 0.0
    %1429 = vmatpush1.msra.mxu0 0.0
    %1430 = vmatprep.subr.mxu0 0.0
    %1431 = vmatpush1.msra.mxu0 0.0
    %1432 = vmatprep.subr.mxu0 0.0
    %1433 = vmatpush1.msra.mxu0 0.0
    %1434 = vmatprep.subr.mxu0 0.0
    %1435 = vmatpush1.msra.mxu0 0.0
    %1436 = vmatprep.subr.mxu0 0.0
    %1437 = vmatpush1.msra.mxu0 0.0
    %1438 = vmatprep.subr.mxu0 0.0
    %1439 = vmatpush1.msra.mxu0 0.0
    %1440 = vmatprep.subr.mxu0 0.0
    %1441 = vmatpush1.msra.mxu0 0.0
    %1442 = vmatprep.subr.mxu0 0.0
    %1443 = vmatpush1.msra.mxu0 0.0
    %1444 = vmatprep.subr.mxu0 0.0
    %1445 = vmatpush1.msra.mxu0 0.0
    %1446 = vmatprep.subr.mxu0 0.0
    %1447 = vmatpush1.msra.mxu0 0.0
    %1448 = vmatprep.mubr.f32.mxu0 0.0
    %1449 = vmatmul.mubr.f32.gmra.mrb[0].mxu0 %v1382
    %v1450 = vpop.f32.mrb[0].mxu0
    %v1451 = vadd.f32 %v1379, %v1450
    %v1452 = vpop.f32.mrb[0].mxu0
    %v1453 = vadd.f32 %v1379, %v1452
    %1454 = vdwg.mxu0
    %1455 = vmatprep.subr.mxu0 %v1347
    %1456 = vmatpush1.msra.mxu0 %v1346
    %1457 = vmatprep.subr.mxu0 %v1355
    %1458 = vmatpush1.msra.mxu0 %v1354
    %1459 = vmatprep.subr.mxu0 %v1363
    %1460 = vmatpush1.msra.mxu0 %v1362
    %1461 = vmatprep.subr.mxu0 %v1371
    %1462 = vmatpush1.msra.mxu0 %v1370
    %1463 = vmatprep.subr.mxu0 0.0
    %1464 = vmatpush1.msra.mxu0 0.0
    %1465 = vmatprep.subr.mxu0 0.0
    %1466 = vmatpush1.msra.mxu0 0.0
    %1467 = vmatprep.subr.mxu0 0.0
    %1468 = vmatpush1.msra.mxu0 0.0
    %1469 = vmatprep.subr.mxu0 0.0
    %1470 = vmatpush1.msra.mxu0 0.0
    %1471 = vmatprep.subr.mxu0 0.0
    %1472 = vmatpush1.msra.mxu0 0.0
    %1473 = vmatprep.subr.mxu0 0.0
    %1474 = vmatpush1.msra.mxu0 0.0
    %1475 = vmatprep.subr.mxu0 0.0
    %1476 = vmatpush1.msra.mxu0 0.0
    %1477 = vmatprep.subr.mxu0 0.0
    %1478 = vmatpush1.msra.mxu0 0.0
    %1479 = vmatprep.subr.mxu0 0.0
    %1480 = vmatpush1.msra.mxu0 0.0
    %1481 = vmatprep.subr.mxu0 0.0
    %1482 = vmatpush1.msra.mxu0 0.0
    %1483 = vmatprep.subr.mxu0 0.0
    %1484 = vmatpush1.msra.mxu0 0.0
    %1485 = vmatprep.subr.mxu0 0.0
    %1486 = vmatpush1.msra.mxu0 0.0
    %1487 = vmatprep.subr.mxu0 0.0
    %1488 = vmatpush1.msra.mxu0 0.0
    %1489 = vmatprep.subr.mxu0 0.0
    %1490 = vmatpush1.msra.mxu0 0.0
    %1491 = vmatprep.subr.mxu0 0.0
    %1492 = vmatpush1.msra.mxu0 0.0
    %1493 = vmatprep.subr.mxu0 0.0
    %1494 = vmatpush1.msra.mxu0 0.0
    %1495 = vmatprep.subr.mxu0 0.0
    %1496 = vmatpush1.msra.mxu0 0.0
    %1497 = vmatprep.subr.mxu0 0.0
    %1498 = vmatpush1.msra.mxu0 0.0
    %1499 = vmatprep.subr.mxu0 0.0
    %1500 = vmatpush1.msra.mxu0 0.0
    %1501 = vmatprep.subr.mxu0 0.0
    %1502 = vmatpush1.msra.mxu0 0.0
    %1503 = vmatprep.subr.mxu0 0.0
    %1504 = vmatpush1.msra.mxu0 0.0
    %1505 = vmatprep.subr.mxu0 0.0
    %1506 = vmatpush1.msra.mxu0 0.0
    %1507 = vmatprep.subr.mxu0 0.0
    %1508 = vmatpush1.msra.mxu0 0.0
    %1509 = vmatprep.subr.mxu0 0.0
    %1510 = vmatpush1.msra.mxu0 0.0
    %1511 = vmatprep.subr.mxu0 0.0
    %1512 = vmatpush1.msra.mxu0 0.0
    %1513 = vmatprep.subr.mxu0 0.0
    %1514 = vmatpush1.msra.mxu0 0.0
    %1515 = vmatprep.subr.mxu0 0.0
    %1516 = vmatpush1.msra.mxu0 0.0
    %1517 = vmatprep.subr.mxu0 0.0
    %1518 = vmatpush1.msra.mxu0 0.0
    %1519 = vmatprep.mubr.f32.mxu0 0.0
    %1520 = vmatmul.mubr.f32.gmra.mrb[0].mxu0 %v1382
    %v1521 = vpop.f32.mrb[0].mxu0
    %v1522 = vadd.f32 %v1379, %v1521
    %v1523 = vpop.f32.mrb[0].mxu0
    %v1524 = vadd.f32 %v1379, %v1523
    %1525 = vdwg.mxu0
    %1526 = vmatprep.subr.mxu0 %v1349
    %1527 = vmatpush1.msra.mxu0 %v1348
    %1528 = vmatprep.subr.mxu0 %v1357
    %1529 = vmatpush1.msra.mxu0 %v1356
    %1530 = vmatprep.subr.mxu0 %v1365
    %1531 = vmatpush1.msra.mxu0 %v1364
    %1532 = vmatprep.subr.mxu0 %v1373
    %1533 = vmatpush1.msra.mxu0 %v1372
    %1534 = vmatprep.subr.mxu0 0.0
    %1535 = vmatpush1.msra.mxu0 0.0
    %1536 = vmatprep.subr.mxu0 0.0
    %1537 = vmatpush1.msra.mxu0 0.0
    %1538 = vmatprep.subr.mxu0 0.0
    %1539 = vmatpush1.msra.mxu0 0.0
    %1540 = vmatprep.subr.mxu0 0.0
    %1541 = vmatpush1.msra.mxu0 0.0
    %1542 = vmatprep.subr.mxu0 0.0
    %1543 = vmatpush1.msra.mxu0 0.0
    %1544 = vmatprep.subr.mxu0 0.0
    %1545 = vmatpush1.msra.mxu0 0.0
    %1546 = vmatprep.subr.mxu0 0.0
    %1547 = vmatpush1.msra.mxu0 0.0
    %1548 = vmatprep.subr.mxu0 0.0
    %1549 = vmatpush1.msra.mxu0 0.0
    %1550 = vmatprep.subr.mxu0 0.0
    %1551 = vmatpush1.msra.mxu0 0.0
    %1552 = vmatprep.subr.mxu0 0.0
    %1553 = vmatpush1.msra.mxu0 0.0
    %1554 = vmatprep.subr.mxu0 0.0
    %1555 = vmatpush1.msra.mxu0 0.0
    %1556 = vmatprep.subr.mxu0 0.0
    %1557 = vmatpush1.msra.mxu0 0.0
    %1558 = vmatprep.subr.mxu0 0.0
    %1559 = vmatpush1.msra.mxu0 0.0
    %1560 = vmatprep.subr.mxu0 0.0
    %1561 = vmatpush1.msra.mxu0 0.0
    %1562 = vmatprep.subr.mxu0 0.0
    %1563 = vmatpush1.msra.mxu0 0.0
    %1564 = vmatprep.subr.mxu0 0.0
    %1565 = vmatpush1.msra.mxu0 0.0
    %1566 = vmatprep.subr.mxu0 0.0
    %1567 = vmatpush1.msra.mxu0 0.0
    %1568 = vmatprep.subr.mxu0 0.0
    %1569 = vmatpush1.msra.mxu0 0.0
    %1570 = vmatprep.subr.mxu0 0.0
    %1571 = vmatpush1.msra.mxu0 0.0
    %1572 = vmatprep.subr.mxu0 0.0
    %1573 = vmatpush1.msra.mxu0 0.0
    %1574 = vmatprep.subr.mxu0 0.0
    %1575 = vmatpush1.msra.mxu0 0.0
    %1576 = vmatprep.subr.mxu0 0.0
    %1577 = vmatpush1.msra.mxu0 0.0
    %1578 = vmatprep.subr.mxu0 0.0
    %1579 = vmatpush1.msra.mxu0 0.0
    %1580 = vmatprep.subr.mxu0 0.0
    %1581 = vmatpush1.msra.mxu0 0.0
    %1582 = vmatprep.subr.mxu0 0.0
    %1583 = vmatpush1.msra.mxu0 0.0
    %1584 = vmatprep.subr.mxu0 0.0
    %1585 = vmatpush1.msra.mxu0 0.0
    %1586 = vmatprep.subr.mxu0 0.0
    %1587 = vmatpush1.msra.mxu0 0.0
    %1588 = vmatprep.subr.mxu0 0.0
    %1589 = vmatpush1.msra.mxu0 0.0
    %1590 = vmatprep.mubr.f32.mxu0 0.0
    %1591 = vmatmul.mubr.f32.gmra.mrb[0].mxu0 %v1382
    %v1592 = vpop.f32.mrb[0].mxu0
    %v1593 = vadd.f32 %v1379, %v1592
    %v1594 = vpop.f32.mrb[0].mxu0
    %v1595 = vadd.f32 %v1379, %v1594
    %1596 = vdwg.mxu0
    %1597 = vmatprep.subr.mxu0 %v1351
    %1598 = vmatpush1.msra.mxu0 %v1350
    %1599 = vmatprep.subr.mxu0 %v1359
    %1600 = vmatpush1.msra.mxu0 %v1358
    %1601 = vmatprep.subr.mxu0 %v1367
    %1602 = vmatpush1.msra.mxu0 %v1366
    %1603 = vmatprep.subr.mxu0 %v1375
    %1604 = vmatpush1.msra.mxu0 %v1374
    %1605 = vmatprep.subr.mxu0 0.0
    %1606 = vmatpush1.msra.mxu0 0.0
    %1607 = vmatprep.subr.mxu0 0.0
    %1608 = vmatpush1.msra.mxu0 0.0
    %1609 = vmatprep.subr.mxu0 0.0
    %1610 = vmatpush1.msra.mxu0 0.0
    %1611 = vmatprep.subr.mxu0 0.0
    %1612 = vmatpush1.msra.mxu0 0.0
    %1613 = vmatprep.subr.mxu0 0.0
    %1614 = vmatpush1.msra.mxu0 0.0
    %1615 = vmatprep.subr.mxu0 0.0
    %1616 = vmatpush1.msra.mxu0 0.0
    %1617 = vmatprep.subr.mxu0 0.0
    %1618 = vmatpush1.msra.mxu0 0.0
    %1619 = vmatprep.subr.mxu0 0.0
    %1620 = vmatpush1.msra.mxu0 0.0
    %1621 = vmatprep.subr.mxu0 0.0
    %1622 = vmatpush1.msra.mxu0 0.0
    %1623 = vmatprep.subr.mxu0 0.0
    %1624 = vmatpush1.msra.mxu0 0.0
    %1625 = vmatprep.subr.mxu0 0.0
    %1626 = vmatpush1.msra.mxu0 0.0
    %1627 = vmatprep.subr.mxu0 0.0
    %1628 = vmatpush1.msra.mxu0 0.0
    %1629 = vmatprep.subr.mxu0 0.0
    %1630 = vmatpush1.msra.mxu0 0.0
    %1631 = vmatprep.subr.mxu0 0.0
    %1632 = vmatpush1.msra.mxu0 0.0
    %1633 = vmatprep.subr.mxu0 0.0
    %1634 = vmatpush1.msra.mxu0 0.0
    %1635 = vmatprep.subr.mxu0 0.0
    %1636 = vmatpush1.msra.mxu0 0.0
    %1637 = vmatprep.subr.mxu0 0.0
    %1638 = vmatpush1.msra.mxu0 0.0
    %1639 = vmatprep.subr.mxu0 0.0
    %1640 = vmatpush1.msra.mxu0 0.0
    %1641 = vmatprep.subr.mxu0 0.0
    %1642 = vmatpush1.msra.mxu0 0.0
    %1643 = vmatprep.subr.mxu0 0.0
    %1644 = vmatpush1.msra.mxu0 0.0
    %1645 = vmatprep.subr.mxu0 0.0
    %1646 = vmatpush1.msra.mxu0 0.0
    %1647 = vmatprep.subr.mxu0 0.0
    %1648 = vmatpush1.msra.mxu0 0.0
    %1649 = vmatprep.subr.mxu0 0.0
    %1650 = vmatpush1.msra.mxu0 0.0
    %1651 = vmatprep.subr.mxu0 0.0
    %1652 = vmatpush1.msra.mxu0 0.0
    %1653 = vmatprep.subr.mxu0 0.0
    %1654 = vmatpush1.msra.mxu0 0.0
    %1655 = vmatprep.subr.mxu0 0.0
    %1656 = vmatpush1.msra.mxu0 0.0
    %1657 = vmatprep.subr.mxu0 0.0
    %1658 = vmatpush1.msra.mxu0 0.0
    %1659 = vmatprep.subr.mxu0 0.0
    %1660 = vmatpush1.msra.mxu0 0.0
    %1661 = vmatprep.mubr.f32.mxu0 0.0
    %1662 = vmatmul.mubr.f32.gmra.mrb[0].mxu0 %v1382
    %v1663 = vpop.f32.mrb[0].mxu0
    %v1664 = vadd.f32 %v1379, %v1663
    %v1665 = vpop.f32.mrb[0].mxu0
    %v1666 = vadd.f32 %v1379, %v1665
    %1667 = vdwg.mxu0
    %v1676 = vcombine.low %v1451, %v1453
    %v1677 = vcombine.low %v1522, %v1524
    %v1679 = vunpack.c.l.s4 1983009808
    %v1680 = vunpack.c.0.s8 %v1679
    %v1681 = vlaneseq
    %v1682 = vshrl.u32 %v1681, 7
    %v1683 = vsub.s32 %v1680, %v1682
    %v1684 = vrot.slane %v1676, %v1683
    %v1686 = vunpack.c.l.s4 1983009808
    %v1687 = vunpack.c.0.s8 %v1686
    %v1688 = vlaneseq
    %v1689 = vshrl.u32 %v1688, 7
    %v1690 = vsub.s32 %v1687, %v1689
    %v1691 = vrot.slane %v1677, %v1690
    %v1692 = vcombine.low %v1684, %v1691
    %v1693 = vcombine.low %v1593, %v1595
    %v1694 = vcombine.low %v1664, %v1666
    %v1696 = vunpack.c.l.s4 1983009808
    %v1697 = vunpack.c.0.s8 %v1696
    %v1698 = vlaneseq
    %v1699 = vshrl.u32 %v1698, 7
    %v1700 = vsub.s32 %v1697, %v1699
    %v1701 = vrot.slane %v1693, %v1700
    %v1703 = vunpack.c.l.s4 1983009808
    %v1704 = vunpack.c.0.s8 %v1703
    %v1705 = vlaneseq
    %v1706 = vshrl.u32 %v1705, 7
    %v1707 = vsub.s32 %v1704, %v1706
    %v1708 = vrot.slane %v1694, %v1707
    %v1709 = vcombine.low %v1701, %v1708
    %1712 = vst [vmem:[#allocation2] sm:$0xff] %v1692
    %1713 = vst [vmem:[#allocation2 + $0x8] sm:$0xff] %v1709
    // Predicated region
    $region10: #{forward.1} parent=1 // pred_check
      _
    $region11: #{forward.1} parent=1 // pred_check_branch
      %1715 = sbr.rel (0) target = $region13
    $region12: #{forward.1} parent=1 // pred_region
      %s1717 = ssub.s32 256, 256
      %1718 = vsyncadd [#allocation3], %s1717
      %s1720 = sshll.u32 [#allocation2], 4
      %s1721 = int_to_ptr.vmem [resolvable:$true] %s1720
      %1723 = dma.vmem_to_hbm [thread:$0]  %s1721, 256, %s2, [#allocation3]
    $region13: #{forward.1} parent=1 // pred_fallthru
      _
    // Predicated region
    $region14: #{forward.1} parent=1 // pred_check
      _
    $region15: #{forward.1} parent=1 // pred_check_branch
      %1725 = sbr.rel (0) target = $region17
    $region16: #{forward.1} parent=1 // pred_region
      %1726 = dma.done [#allocation3], 256
    $region17: #{forward.1} parent=1 // pred_fallthru
      _
    %1727 = vsyncpa [#allocation3], 1

</llo_original>
